<compile_context>
chip_gen: v7x
topology: tpu7x:2x2x1
jax: 0.10.0
libtpu: 0.0.40
codegen_flags: <defaults>
</compile_context>

<pallas_src>
import jax
import jax.numpy as jnp
import numpy as np
from jax.experimental import pallas as pl
from jax.experimental.pallas import tpu as pltpu

HIDDEN = 64
NEG_FILL = -1000000000.0


def actor_gru_kernel(x_ref, h0_ref, wih_ref, bgi_ref, whh_ref, bhn_ref,
                     wout_ref, bout_ref, mask_ref,
                     logits_ref, hout_ref, h_all_scr):
    T = x_ref.shape[0]
    H = HIDDEN

    # --- Hoisted input projection: one batched matmul for every gate/timestep.
    # gi_all[:, 0:H]   = W_ir x + b_ir + b_hr
    # gi_all[:, H:2H]  = W_iz x + b_iz + b_hz
    # gi_all[:, 2H:3H] = W_in x + b_in          (b_hn kept separate, see below)
    gi_all = jnp.dot(x_ref[...], wih_ref[...],
                     preferred_element_type=jnp.float32) + bgi_ref[...]   # (T, 3H)

    whh = whh_ref[...]      # (H, 3H) fused hidden weights (r | z | n)
    bhn = bhn_ref[...]      # (1, H)  hidden bias of the n-gate

    # --- Sequential GRU recurrence (the only truly serial part).
    h = h0_ref[...]         # (1, H)
    for t in range(T):      # static unroll (T is small & compile-time constant)
        gi_t = gi_all[t:t + 1, :]                                        # (1, 3H)
        gh = jnp.dot(h, whh, preferred_element_type=jnp.float32)         # (1, 3H)

        r = jax.nn.sigmoid(gi_t[:, 0:H] + gh[:, 0:H])
        z = jax.nn.sigmoid(gi_t[:, H:2 * H] + gh[:, H:2 * H])
        n = jnp.tanh(gi_t[:, 2 * H:3 * H] + r * (gh[:, 2 * H:3 * H] + bhn))
        h = (1.0 - z) * n + z * h

        h_all_scr[pl.ds(t, 1), :] = h                                    # (1, H)

    # Final hidden state written exactly once.
    hout_ref[...] = h

    # --- Batched output layer + mask fill on the whole (T, action_dim) slab.
    logits = jnp.dot(h_all_scr[...], wout_ref[...],
                     preferred_element_type=jnp.float32) + bout_ref[...]  # (T, A)
    logits_ref[...] = jnp.where(mask_ref[...] != 0.0, logits,
                                jnp.float32(NEG_FILL))


def actor_gru_forward(states, h, params, mask_f, J):
    """states: (T, 2*J + 1) f32 (last column = epoch index, dropped);
    h: None or (HIDDEN,) f32."""
    state_dim = 2 * J
    action_dim = J * J
    T = states.shape[0]

    wih_k, bgi_k, whh_k, bhn_k, wout_k, bout_k = params

    x = states[:, :state_dim].astype(jnp.float32)                 # (T, state_dim)
    if h is None:
        h0 = jnp.zeros((1, HIDDEN), jnp.float32)
    else:
        h0 = h.reshape(1, HIDDEN).astype(jnp.float32)

    logits_flat, h_out = pl.pallas_call(
        actor_gru_kernel,
        out_shape=(jax.ShapeDtypeStruct((T, action_dim), jnp.float32),
                   jax.ShapeDtypeStruct((1, HIDDEN), jnp.float32)),
        scratch_shapes=[pltpu.VMEM((T, HIDDEN), jnp.float32)],
    )(x, h0, wih_k, bgi_k, whh_k, bhn_k, wout_k, bout_k, mask_f)

    return logits_flat.reshape(T, J, J), h_out.reshape(HIDDEN)


def make_kernel_params(w_ih, w_hh, b_ih, b_hh, w_out, b_out, J):
    """Repack PyTorch-layout GRUCell/Linear parameters for the kernel."""
    H = HIDDEN
    action_dim = J * J
    wih_k = w_ih.T                                            # (state_dim, 3H)
    whh_k = w_hh.T                                            # (H, 3H)
    # Fold b_ih (all gates) + b_hh (r, z gates only) into the gi bias.
    bgi_k = (b_ih + jnp.concatenate(
        [b_hh[:2 * H], jnp.zeros((H,), jnp.float32)])).reshape(1, 3 * H)
    bhn_k = b_hh[2 * H:].reshape(1, H)                        # b_hh of n-gate
    wout_k = w_out.T                                          # (H, action_dim)
    bout_k = b_out.reshape(1, action_dim)
    return (wih_k, bgi_k, whh_k, bhn_k, wout_k, bout_k)


def reference_forward(states, h, w_ih, w_hh, b_ih, b_hh, w_out, b_out, mask, J):
    """Pure-JAX replica of the PyTorch forward (for validation)."""
    state_dim = 2 * J
    x_all = states[:, :state_dim]
    if h is None:
        h = jnp.zeros((HIDDEN,), jnp.float32)

    def step(h, x):
        gi = w_ih @ x + b_ih
        gh = w_hh @ h + b_hh
        i_r, i_z, i_n = jnp.split(gi, 3)
        h_r, h_z, h_n = jnp.split(gh, 3)
        r = jax.nn.sigmoid(i_r + h_r)
        z = jax.nn.sigmoid(i_z + h_z)
        n = jnp.tanh(i_n + r * h_n)
        h_new = (1.0 - z) * n + z * h
        logit = (w_out @ h_new + b_out).reshape(J, J)
        logit = jnp.where(mask == 0, NEG_FILL, logit)
        return h_new, logit

    h_final, logits = jax.lax.scan(step, h, x_all)
    return logits, h_final


if __name__ == "__main__":
    J = 4                       # num_pools
    state_dim = 2 * J
    action_dim = J * J
    T = 8

    key = jax.random.PRNGKey(0)
    k_ih, k_hh, k_out, k_bih, k_bhh, k_bout, k_x = jax.random.split(key, 7)

    # Kaiming-normal-like weights (std = sqrt(2/fan_in)).  The PyTorch module
    # initializes biases to 0; we use small nonzero biases here purely to
    # exercise/validate the kernel's bias-folding path (semantics unchanged).
    w_ih = jax.random.normal(k_ih, (3 * HIDDEN, state_dim), jnp.float32) * jnp.sqrt(2.0 / state_dim)
    w_hh = jax.random.normal(k_hh, (3 * HIDDEN, HIDDEN), jnp.float32) * jnp.sqrt(2.0 / HIDDEN)
    b_ih = jax.random.normal(k_bih, (3 * HIDDEN,), jnp.float32) * 0.05
    b_hh = jax.random.normal(k_bhh, (3 * HIDDEN,), jnp.float32) * 0.05
    w_out = jax.random.normal(k_out, (action_dim, HIDDEN), jnp.float32) * jnp.sqrt(2.0 / HIDDEN)
    b_out = jax.random.normal(k_bout, (action_dim,), jnp.float32) * 0.05

    # Deterministic mask (config['mask']) with a mix of 0s and 1s.
    mask = jnp.array([[1 if (i + j) % 2 == 0 else 0 for j in range(J)]
                      for i in range(J)], dtype=jnp.int32)
    mask_f = mask.astype(jnp.float32).reshape(1, action_dim)   # 1.0 = keep

    params = make_kernel_params(w_ih, w_hh, b_ih, b_hh, w_out, b_out, J)

    # Inputs: (T, state_dim + 1); last column is the epoch index (dropped).
    states_core = jax.random.normal(k_x, (T, state_dim), jnp.float32)
    epoch_idx = jnp.arange(T, dtype=jnp.float32).reshape(T, 1)
    states = jnp.concatenate([states_core, epoch_idx], axis=1)

    logits, h_new = actor_gru_forward(states, None, params, mask_f, J)
    logits = jax.block_until_ready(logits)
    h_new = jax.block_until_ready(h_new)

    # Validate against the pure-JAX reference of the PyTorch forward.
    ref_logits, ref_h = reference_forward(states, None, w_ih, w_hh, b_ih, b_hh,
                                          w_out, b_out, mask, J)
    assert logits.shape == (T, J, J) and h_new.shape == (HIDDEN,)
    np.testing.assert_allclose(np.asarray(logits), np.asarray(ref_logits),
                               rtol=1e-4, atol=1e-4)
    np.testing.assert_allclose(np.asarray(h_new), np.asarray(ref_h),
                               rtol=1e-4, atol=1e-4)

    print("KERNEL_OK")
</pallas_src>

<mosaic_0001>
module attributes {stable_mosaic.version = 11 : i64} {
  func.func @actor_gru_kernel(%arg0: memref<8x8xf32, #tpu.memory_space<vmem>>, %arg1: memref<1x64xf32, #tpu.memory_space<vmem>>, %arg2: memref<8x192xf32, #tpu.memory_space<vmem>>, %arg3: memref<1x192xf32, #tpu.memory_space<vmem>>, %arg4: memref<64x192xf32, #tpu.memory_space<vmem>>, %arg5: memref<1x64xf32, #tpu.memory_space<vmem>>, %arg6: memref<64x16xf32, #tpu.memory_space<vmem>>, %arg7: memref<1x16xf32, #tpu.memory_space<vmem>>, %arg8: memref<1x16xf32, #tpu.memory_space<vmem>>, %arg9: memref<8x16xf32, #tpu.memory_space<vmem>>, %arg10: memref<1x64xf32, #tpu.memory_space<vmem>>, %arg11: memref<8x64xf32, #tpu.memory_space<vmem>>) attributes {dimension_semantics = [], scalar_prefetch = 0 : i64, scratch_operands = 1 : i64, tpu.core_type = #tpu.core_type<tc>} {
    %c0 = arith.constant 0 : index
    %c0_0 = arith.constant 0 : index
    %0 = vector.load %arg0[%c0, %c0_0] : memref<8x8xf32, #tpu.memory_space<vmem>>, vector<8x8xf32>
    %c0_1 = arith.constant 0 : index
    %c0_2 = arith.constant 0 : index
    %1 = vector.load %arg2[%c0_1, %c0_2] : memref<8x192xf32, #tpu.memory_space<vmem>>, vector<8x192xf32>
    %cst = arith.constant dense<0.000000e+00> : vector<8x192xf32>
    %2 = tpu.matmul %0, %1, %cst {dimension_numbers = #tpu.dot_dimension_numbers<[1], [0], [0], [1], [0, 0, 1, 1], [], []>} : vector<8x8xf32>, vector<8x192xf32>, vector<8x192xf32> -> vector<8x192xf32>
    %c0_3 = arith.constant 0 : index
    %c0_4 = arith.constant 0 : index
    %3 = vector.load %arg3[%c0_3, %c0_4] : memref<1x192xf32, #tpu.memory_space<vmem>>, vector<1x192xf32>
    %4 = vector.broadcast %3 : vector<1x192xf32> to vector<8x192xf32>
    %5 = arith.addf %2, %4 : vector<8x192xf32>
    %c0_5 = arith.constant 0 : index
    %c0_6 = arith.constant 0 : index
    %6 = vector.load %arg4[%c0_5, %c0_6] : memref<64x192xf32, #tpu.memory_space<vmem>>, vector<64x192xf32>
    %c0_7 = arith.constant 0 : index
    %c0_8 = arith.constant 0 : index
    %7 = vector.load %arg5[%c0_7, %c0_8] : memref<1x64xf32, #tpu.memory_space<vmem>>, vector<1x64xf32>
    %c0_9 = arith.constant 0 : index
    %c0_10 = arith.constant 0 : index
    %8 = vector.load %arg1[%c0_9, %c0_10] : memref<1x64xf32, #tpu.memory_space<vmem>>, vector<1x64xf32>
    %9 = vector.extract_strided_slice %5 {offsets = [0, 0], sizes = [1, 192], strides = [1, 1]} : vector<8x192xf32> to vector<1x192xf32>
    %cst_11 = arith.constant dense<0.000000e+00> : vector<1x192xf32>
    %10 = tpu.matmul %8, %6, %cst_11 {dimension_numbers = #tpu.dot_dimension_numbers<[1], [0], [0], [1], [0, 0, 1, 1], [], []>} : vector<1x64xf32>, vector<64x192xf32>, vector<1x192xf32> -> vector<1x192xf32>
    %11 = vector.extract_strided_slice %9 {offsets = [0, 0], sizes = [1, 64], strides = [1, 1]} : vector<1x192xf32> to vector<1x64xf32>
    %12 = vector.extract_strided_slice %10 {offsets = [0, 0], sizes = [1, 64], strides = [1, 1]} : vector<1x192xf32> to vector<1x64xf32>
    %13 = arith.addf %11, %12 : vector<1x64xf32>
    %14 = arith.negf %13 : vector<1x64xf32>
    %15 = math.exp %14 : vector<1x64xf32>
    %cst_12 = arith.constant 1.000000e+00 : f32
    %16 = vector.broadcast %cst_12 : f32 to vector<1x64xf32>
    %17 = arith.addf %16, %15 : vector<1x64xf32>
    %18 = arith.divf %16, %17 : vector<1x64xf32>
    %19 = vector.extract_strided_slice %9 {offsets = [0, 64], sizes = [1, 64], strides = [1, 1]} : vector<1x192xf32> to vector<1x64xf32>
    %20 = vector.extract_strided_slice %10 {offsets = [0, 64], sizes = [1, 64], strides = [1, 1]} : vector<1x192xf32> to vector<1x64xf32>
    %21 = arith.addf %19, %20 : vector<1x64xf32>
    %22 = arith.negf %21 : vector<1x64xf32>
    %23 = math.exp %22 : vector<1x64xf32>
    %cst_13 = arith.constant 1.000000e+00 : f32
    %24 = vector.broadcast %cst_13 : f32 to vector<1x64xf32>
    %25 = arith.addf %24, %23 : vector<1x64xf32>
    %26 = arith.divf %24, %25 : vector<1x64xf32>
    %27 = vector.extract_strided_slice %9 {offsets = [0, 128], sizes = [1, 64], strides = [1, 1]} : vector<1x192xf32> to vector<1x64xf32>
    %28 = vector.extract_strided_slice %10 {offsets = [0, 128], sizes = [1, 64], strides = [1, 1]} : vector<1x192xf32> to vector<1x64xf32>
    %29 = arith.addf %28, %7 : vector<1x64xf32>
    %30 = arith.mulf %18, %29 : vector<1x64xf32>
    %31 = arith.addf %27, %30 : vector<1x64xf32>
    %32 = math.tanh %31 : vector<1x64xf32>
    %cst_14 = arith.constant 1.000000e+00 : f32
    %33 = vector.broadcast %cst_14 : f32 to vector<1x64xf32>
    %34 = arith.subf %33, %26 : vector<1x64xf32>
    %35 = arith.mulf %34, %32 : vector<1x64xf32>
    %36 = arith.mulf %26, %8 : vector<1x64xf32>
    %37 = arith.addf %35, %36 : vector<1x64xf32>
    %c0_15 = arith.constant 0 : index
    %c0_16 = arith.constant 0 : index
    %38 = vector.load %arg11[%c0_15, %c0_16] : memref<8x64xf32, #tpu.memory_space<vmem>>, vector<1x64xf32>
    tpu.vector_store %arg11[%c0_15, %c0_16], %37 {strides = array<i32>} : memref<8x64xf32, #tpu.memory_space<vmem>>, vector<1x64xf32>,
    %39 = vector.extract_strided_slice %5 {offsets = [1, 0], sizes = [1, 192], strides = [1, 1]} : vector<8x192xf32> to vector<1x192xf32>
    %cst_17 = arith.constant dense<0.000000e+00> : vector<1x192xf32>
    %40 = tpu.matmul %37, %6, %cst_17 {dimension_numbers = #tpu.dot_dimension_numbers<[1], [0], [0], [1], [0, 0, 1, 1], [], []>} : vector<1x64xf32>, vector<64x192xf32>, vector<1x192xf32> -> vector<1x192xf32>
    %41 = vector.extract_strided_slice %39 {offsets = [0, 0], sizes = [1, 64], strides = [1, 1]} : vector<1x192xf32> to vector<1x64xf32>
    %42 = vector.extract_strided_slice %40 {offsets = [0, 0], sizes = [1, 64], strides = [1, 1]} : vector<1x192xf32> to vector<1x64xf32>
    %43 = arith.addf %41, %42 : vector<1x64xf32>
    %44 = arith.negf %43 : vector<1x64xf32>
    %45 = math.exp %44 : vector<1x64xf32>
    %cst_18 = arith.constant 1.000000e+00 : f32
    %46 = vector.broadcast %cst_18 : f32 to vector<1x64xf32>
    %47 = arith.addf %46, %45 : vector<1x64xf32>
    %48 = arith.divf %46, %47 : vector<1x64xf32>
    %49 = vector.extract_strided_slice %39 {offsets = [0, 64], sizes = [1, 64], strides = [1, 1]} : vector<1x192xf32> to vector<1x64xf32>
    %50 = vector.extract_strided_slice %40 {offsets = [0, 64], sizes = [1, 64], strides = [1, 1]} : vector<1x192xf32> to vector<1x64xf32>
    %51 = arith.addf %49, %50 : vector<1x64xf32>
    %52 = arith.negf %51 : vector<1x64xf32>
    %53 = math.exp %52 : vector<1x64xf32>
    %cst_19 = arith.constant 1.000000e+00 : f32
    %54 = vector.broadcast %cst_19 : f32 to vector<1x64xf32>
    %55 = arith.addf %54, %53 : vector<1x64xf32>
    %56 = arith.divf %54, %55 : vector<1x64xf32>
    %57 = vector.extract_strided_slice %39 {offsets = [0, 128], sizes = [1, 64], strides = [1, 1]} : vector<1x192xf32> to vector<1x64xf32>
    %58 = vector.extract_strided_slice %40 {offsets = [0, 128], sizes = [1, 64], strides = [1, 1]} : vector<1x192xf32> to vector<1x64xf32>
    %59 = arith.addf %58, %7 : vector<1x64xf32>
    %60 = arith.mulf %48, %59 : vector<1x64xf32>
    %61 = arith.addf %57, %60 : vector<1x64xf32>
    %62 = math.tanh %61 : vector<1x64xf32>
    %cst_20 = arith.constant 1.000000e+00 : f32
    %63 = vector.broadcast %cst_20 : f32 to vector<1x64xf32>
    %64 = arith.subf %63, %56 : vector<1x64xf32>
    %65 = arith.mulf %64, %62 : vector<1x64xf32>
    %66 = arith.mulf %56, %37 : vector<1x64xf32>
    %67 = arith.addf %65, %66 : vector<1x64xf32>
    %c1 = arith.constant 1 : index
    %c0_21 = arith.constant 0 : index
    %68 = vector.load %arg11[%c1, %c0_21] : memref<8x64xf32, #tpu.memory_space<vmem>>, vector<1x64xf32>
    tpu.vector_store %arg11[%c1, %c0_21], %67 {strides = array<i32>} : memref<8x64xf32, #tpu.memory_space<vmem>>, vector<1x64xf32>,
    %69 = vector.extract_strided_slice %5 {offsets = [2, 0], sizes = [1, 192], strides = [1, 1]} : vector<8x192xf32> to vector<1x192xf32>
    %cst_22 = arith.constant dense<0.000000e+00> : vector<1x192xf32>
    %70 = tpu.matmul %67, %6, %cst_22 {dimension_numbers = #tpu.dot_dimension_numbers<[1], [0], [0], [1], [0, 0, 1, 1], [], []>} : vector<1x64xf32>, vector<64x192xf32>, vector<1x192xf32> -> vector<1x192xf32>
    %71 = vector.extract_strided_slice %69 {offsets = [0, 0], sizes = [1, 64], strides = [1, 1]} : vector<1x192xf32> to vector<1x64xf32>
    %72 = vector.extract_strided_slice %70 {offsets = [0, 0], sizes = [1, 64], strides = [1, 1]} : vector<1x192xf32> to vector<1x64xf32>
    %73 = arith.addf %71, %72 : vector<1x64xf32>
    %74 = arith.negf %73 : vector<1x64xf32>
    %75 = math.exp %74 : vector<1x64xf32>
    %cst_23 = arith.constant 1.000000e+00 : f32
    %76 = vector.broadcast %cst_23 : f32 to vector<1x64xf32>
    %77 = arith.addf %76, %75 : vector<1x64xf32>
    %78 = arith.divf %76, %77 : vector<1x64xf32>
    %79 = vector.extract_strided_slice %69 {offsets = [0, 64], sizes = [1, 64], strides = [1, 1]} : vector<1x192xf32> to vector<1x64xf32>
    %80 = vector.extract_strided_slice %70 {offsets = [0, 64], sizes = [1, 64], strides = [1, 1]} : vector<1x192xf32> to vector<1x64xf32>
    %81 = arith.addf %79, %80 : vector<1x64xf32>
    %82 = arith.negf %81 : vector<1x64xf32>
    %83 = math.exp %82 : vector<1x64xf32>
    %cst_24 = arith.constant 1.000000e+00 : f32
    %84 = vector.broadcast %cst_24 : f32 to vector<1x64xf32>
    %85 = arith.addf %84, %83 : vector<1x64xf32>
    %86 = arith.divf %84, %85 : vector<1x64xf32>
    %87 = vector.extract_strided_slice %69 {offsets = [0, 128], sizes = [1, 64], strides = [1, 1]} : vector<1x192xf32> to vector<1x64xf32>
    %88 = vector.extract_strided_slice %70 {offsets = [0, 128], sizes = [1, 64], strides = [1, 1]} : vector<1x192xf32> to vector<1x64xf32>
    %89 = arith.addf %88, %7 : vector<1x64xf32>
    %90 = arith.mulf %78, %89 : vector<1x64xf32>
    %91 = arith.addf %87, %90 : vector<1x64xf32>
    %92 = math.tanh %91 : vector<1x64xf32>
    %cst_25 = arith.constant 1.000000e+00 : f32
    %93 = vector.broadcast %cst_25 : f32 to vector<1x64xf32>
    %94 = arith.subf %93, %86 : vector<1x64xf32>
    %95 = arith.mulf %94, %92 : vector<1x64xf32>
    %96 = arith.mulf %86, %67 : vector<1x64xf32>
    %97 = arith.addf %95, %96 : vector<1x64xf32>
    %c2 = arith.constant 2 : index
    %c0_26 = arith.constant 0 : index
    %98 = vector.load %arg11[%c2, %c0_26] : memref<8x64xf32, #tpu.memory_space<vmem>>, vector<1x64xf32>
    tpu.vector_store %arg11[%c2, %c0_26], %97 {strides = array<i32>} : memref<8x64xf32, #tpu.memory_space<vmem>>, vector<1x64xf32>,
    %99 = vector.extract_strided_slice %5 {offsets = [3, 0], sizes = [1, 192], strides = [1, 1]} : vector<8x192xf32> to vector<1x192xf32>
    %cst_27 = arith.constant dense<0.000000e+00> : vector<1x192xf32>
    %100 = tpu.matmul %97, %6, %cst_27 {dimension_numbers = #tpu.dot_dimension_numbers<[1], [0], [0], [1], [0, 0, 1, 1], [], []>} : vector<1x64xf32>, vector<64x192xf32>, vector<1x192xf32> -> vector<1x192xf32>
    %101 = vector.extract_strided_slice %99 {offsets = [0, 0], sizes = [1, 64], strides = [1, 1]} : vector<1x192xf32> to vector<1x64xf32>
    %102 = vector.extract_strided_slice %100 {offsets = [0, 0], sizes = [1, 64], strides = [1, 1]} : vector<1x192xf32> to vector<1x64xf32>
    %103 = arith.addf %101, %102 : vector<1x64xf32>
    %104 = arith.negf %103 : vector<1x64xf32>
    %105 = math.exp %104 : vector<1x64xf32>
    %cst_28 = arith.constant 1.000000e+00 : f32
    %106 = vector.broadcast %cst_28 : f32 to vector<1x64xf32>
    %107 = arith.addf %106, %105 : vector<1x64xf32>
    %108 = arith.divf %106, %107 : vector<1x64xf32>
    %109 = vector.extract_strided_slice %99 {offsets = [0, 64], sizes = [1, 64], strides = [1, 1]} : vector<1x192xf32> to vector<1x64xf32>
    %110 = vector.extract_strided_slice %100 {offsets = [0, 64], sizes = [1, 64], strides = [1, 1]} : vector<1x192xf32> to vector<1x64xf32>
    %111 = arith.addf %109, %110 : vector<1x64xf32>
    %112 = arith.negf %111 : vector<1x64xf32>
    %113 = math.exp %112 : vector<1x64xf32>
    %cst_29 = arith.constant 1.000000e+00 : f32
    %114 = vector.broadcast %cst_29 : f32 to vector<1x64xf32>
    %115 = arith.addf %114, %113 : vector<1x64xf32>
    %116 = arith.divf %114, %115 : vector<1x64xf32>
    %117 = vector.extract_strided_slice %99 {offsets = [0, 128], sizes = [1, 64], strides = [1, 1]} : vector<1x192xf32> to vector<1x64xf32>
    %118 = vector.extract_strided_slice %100 {offsets = [0, 128], sizes = [1, 64], strides = [1, 1]} : vector<1x192xf32> to vector<1x64xf32>
    %119 = arith.addf %118, %7 : vector<1x64xf32>
    %120 = arith.mulf %108, %119 : vector<1x64xf32>
    %121 = arith.addf %117, %120 : vector<1x64xf32>
    %122 = math.tanh %121 : vector<1x64xf32>
    %cst_30 = arith.constant 1.000000e+00 : f32
    %123 = vector.broadcast %cst_30 : f32 to vector<1x64xf32>
    %124 = arith.subf %123, %116 : vector<1x64xf32>
    %125 = arith.mulf %124, %122 : vector<1x64xf32>
    %126 = arith.mulf %116, %97 : vector<1x64xf32>
    %127 = arith.addf %125, %126 : vector<1x64xf32>
    %c3 = arith.constant 3 : index
    %c0_31 = arith.constant 0 : index
    %128 = vector.load %arg11[%c3, %c0_31] : memref<8x64xf32, #tpu.memory_space<vmem>>, vector<1x64xf32>
    tpu.vector_store %arg11[%c3, %c0_31], %127 {strides = array<i32>} : memref<8x64xf32, #tpu.memory_space<vmem>>, vector<1x64xf32>,
    %129 = vector.extract_strided_slice %5 {offsets = [4, 0], sizes = [1, 192], strides = [1, 1]} : vector<8x192xf32> to vector<1x192xf32>
    %cst_32 = arith.constant dense<0.000000e+00> : vector<1x192xf32>
    %130 = tpu.matmul %127, %6, %cst_32 {dimension_numbers = #tpu.dot_dimension_numbers<[1], [0], [0], [1], [0, 0, 1, 1], [], []>} : vector<1x64xf32>, vector<64x192xf32>, vector<1x192xf32> -> vector<1x192xf32>
    %131 = vector.extract_strided_slice %129 {offsets = [0, 0], sizes = [1, 64], strides = [1, 1]} : vector<1x192xf32> to vector<1x64xf32>
    %132 = vector.extract_strided_slice %130 {offsets = [0, 0], sizes = [1, 64], strides = [1, 1]} : vector<1x192xf32> to vector<1x64xf32>
    %133 = arith.addf %131, %132 : vector<1x64xf32>
    %134 = arith.negf %133 : vector<1x64xf32>
    %135 = math.exp %134 : vector<1x64xf32>
    %cst_33 = arith.constant 1.000000e+00 : f32
    %136 = vector.broadcast %cst_33 : f32 to vector<1x64xf32>
    %137 = arith.addf %136, %135 : vector<1x64xf32>
    %138 = arith.divf %136, %137 : vector<1x64xf32>
    %139 = vector.extract_strided_slice %129 {offsets = [0, 64], sizes = [1, 64], strides = [1, 1]} : vector<1x192xf32> to vector<1x64xf32>
    %140 = vector.extract_strided_slice %130 {offsets = [0, 64], sizes = [1, 64], strides = [1, 1]} : vector<1x192xf32> to vector<1x64xf32>
    %141 = arith.addf %139, %140 : vector<1x64xf32>
    %142 = arith.negf %141 : vector<1x64xf32>
    %143 = math.exp %142 : vector<1x64xf32>
    %cst_34 = arith.constant 1.000000e+00 : f32
    %144 = vector.broadcast %cst_34 : f32 to vector<1x64xf32>
    %145 = arith.addf %144, %143 : vector<1x64xf32>
    %146 = arith.divf %144, %145 : vector<1x64xf32>
    %147 = vector.extract_strided_slice %129 {offsets = [0, 128], sizes = [1, 64], strides = [1, 1]} : vector<1x192xf32> to vector<1x64xf32>
    %148 = vector.extract_strided_slice %130 {offsets = [0, 128], sizes = [1, 64], strides = [1, 1]} : vector<1x192xf32> to vector<1x64xf32>
    %149 = arith.addf %148, %7 : vector<1x64xf32>
    %150 = arith.mulf %138, %149 : vector<1x64xf32>
    %151 = arith.addf %147, %150 : vector<1x64xf32>
    %152 = math.tanh %151 : vector<1x64xf32>
    %cst_35 = arith.constant 1.000000e+00 : f32
    %153 = vector.broadcast %cst_35 : f32 to vector<1x64xf32>
    %154 = arith.subf %153, %146 : vector<1x64xf32>
    %155 = arith.mulf %154, %152 : vector<1x64xf32>
    %156 = arith.mulf %146, %127 : vector<1x64xf32>
    %157 = arith.addf %155, %156 : vector<1x64xf32>
    %c4 = arith.constant 4 : index
    %c0_36 = arith.constant 0 : index
    %158 = vector.load %arg11[%c4, %c0_36] : memref<8x64xf32, #tpu.memory_space<vmem>>, vector<1x64xf32>
    tpu.vector_store %arg11[%c4, %c0_36], %157 {strides = array<i32>} : memref<8x64xf32, #tpu.memory_space<vmem>>, vector<1x64xf32>,
    %159 = vector.extract_strided_slice %5 {offsets = [5, 0], sizes = [1, 192], strides = [1, 1]} : vector<8x192xf32> to vector<1x192xf32>
    %cst_37 = arith.constant dense<0.000000e+00> : vector<1x192xf32>
    %160 = tpu.matmul %157, %6, %cst_37 {dimension_numbers = #tpu.dot_dimension_numbers<[1], [0], [0], [1], [0, 0, 1, 1], [], []>} : vector<1x64xf32>, vector<64x192xf32>, vector<1x192xf32> -> vector<1x192xf32>
    %161 = vector.extract_strided_slice %159 {offsets = [0, 0], sizes = [1, 64], strides = [1, 1]} : vector<1x192xf32> to vector<1x64xf32>
    %162 = vector.extract_strided_slice %160 {offsets = [0, 0], sizes = [1, 64], strides = [1, 1]} : vector<1x192xf32> to vector<1x64xf32>
    %163 = arith.addf %161, %162 : vector<1x64xf32>
    %164 = arith.negf %163 : vector<1x64xf32>
    %165 = math.exp %164 : vector<1x64xf32>
    %cst_38 = arith.constant 1.000000e+00 : f32
    %166 = vector.broadcast %cst_38 : f32 to vector<1x64xf32>
    %167 = arith.addf %166, %165 : vector<1x64xf32>
    %168 = arith.divf %166, %167 : vector<1x64xf32>
    %169 = vector.extract_strided_slice %159 {offsets = [0, 64], sizes = [1, 64], strides = [1, 1]} : vector<1x192xf32> to vector<1x64xf32>
    %170 = vector.extract_strided_slice %160 {offsets = [0, 64], sizes = [1, 64], strides = [1, 1]} : vector<1x192xf32> to vector<1x64xf32>
    %171 = arith.addf %169, %170 : vector<1x64xf32>
    %172 = arith.negf %171 : vector<1x64xf32>
    %173 = math.exp %172 : vector<1x64xf32>
    %cst_39 = arith.constant 1.000000e+00 : f32
    %174 = vector.broadcast %cst_39 : f32 to vector<1x64xf32>
    %175 = arith.addf %174, %173 : vector<1x64xf32>
    %176 = arith.divf %174, %175 : vector<1x64xf32>
    %177 = vector.extract_strided_slice %159 {offsets = [0, 128], sizes = [1, 64], strides = [1, 1]} : vector<1x192xf32> to vector<1x64xf32>
    %178 = vector.extract_strided_slice %160 {offsets = [0, 128], sizes = [1, 64], strides = [1, 1]} : vector<1x192xf32> to vector<1x64xf32>
    %179 = arith.addf %178, %7 : vector<1x64xf32>
    %180 = arith.mulf %168, %179 : vector<1x64xf32>
    %181 = arith.addf %177, %180 : vector<1x64xf32>
    %182 = math.tanh %181 : vector<1x64xf32>
    %cst_40 = arith.constant 1.000000e+00 : f32
    %183 = vector.broadcast %cst_40 : f32 to vector<1x64xf32>
    %184 = arith.subf %183, %176 : vector<1x64xf32>
    %185 = arith.mulf %184, %182 : vector<1x64xf32>
    %186 = arith.mulf %176, %157 : vector<1x64xf32>
    %187 = arith.addf %185, %186 : vector<1x64xf32>
    %c5 = arith.constant 5 : index
    %c0_41 = arith.constant 0 : index
    %188 = vector.load %arg11[%c5, %c0_41] : memref<8x64xf32, #tpu.memory_space<vmem>>, vector<1x64xf32>
    tpu.vector_store %arg11[%c5, %c0_41], %187 {strides = array<i32>} : memref<8x64xf32, #tpu.memory_space<vmem>>, vector<1x64xf32>,
    %189 = vector.extract_strided_slice %5 {offsets = [6, 0], sizes = [1, 192], strides = [1, 1]} : vector<8x192xf32> to vector<1x192xf32>
    %cst_42 = arith.constant dense<0.000000e+00> : vector<1x192xf32>
    %190 = tpu.matmul %187, %6, %cst_42 {dimension_numbers = #tpu.dot_dimension_numbers<[1], [0], [0], [1], [0, 0, 1, 1], [], []>} : vector<1x64xf32>, vector<64x192xf32>, vector<1x192xf32> -> vector<1x192xf32>
    %191 = vector.extract_strided_slice %189 {offsets = [0, 0], sizes = [1, 64], strides = [1, 1]} : vector<1x192xf32> to vector<1x64xf32>
    %192 = vector.extract_strided_slice %190 {offsets = [0, 0], sizes = [1, 64], strides = [1, 1]} : vector<1x192xf32> to vector<1x64xf32>
    %193 = arith.addf %191, %192 : vector<1x64xf32>
    %194 = arith.negf %193 : vector<1x64xf32>
    %195 = math.exp %194 : vector<1x64xf32>
    %cst_43 = arith.constant 1.000000e+00 : f32
    %196 = vector.broadcast %cst_43 : f32 to vector<1x64xf32>
    %197 = arith.addf %196, %195 : vector<1x64xf32>
    %198 = arith.divf %196, %197 : vector<1x64xf32>
    %199 = vector.extract_strided_slice %189 {offsets = [0, 64], sizes = [1, 64], strides = [1, 1]} : vector<1x192xf32> to vector<1x64xf32>
    %200 = vector.extract_strided_slice %190 {offsets = [0, 64], sizes = [1, 64], strides = [1, 1]} : vector<1x192xf32> to vector<1x64xf32>
    %201 = arith.addf %199, %200 : vector<1x64xf32>
    %202 = arith.negf %201 : vector<1x64xf32>
    %203 = math.exp %202 : vector<1x64xf32>
    %cst_44 = arith.constant 1.000000e+00 : f32
    %204 = vector.broadcast %cst_44 : f32 to vector<1x64xf32>
    %205 = arith.addf %204, %203 : vector<1x64xf32>
    %206 = arith.divf %204, %205 : vector<1x64xf32>
    %207 = vector.extract_strided_slice %189 {offsets = [0, 128], sizes = [1, 64], strides = [1, 1]} : vector<1x192xf32> to vector<1x64xf32>
    %208 = vector.extract_strided_slice %190 {offsets = [0, 128], sizes = [1, 64], strides = [1, 1]} : vector<1x192xf32> to vector<1x64xf32>
    %209 = arith.addf %208, %7 : vector<1x64xf32>
    %210 = arith.mulf %198, %209 : vector<1x64xf32>
    %211 = arith.addf %207, %210 : vector<1x64xf32>
    %212 = math.tanh %211 : vector<1x64xf32>
    %cst_45 = arith.constant 1.000000e+00 : f32
    %213 = vector.broadcast %cst_45 : f32 to vector<1x64xf32>
    %214 = arith.subf %213, %206 : vector<1x64xf32>
    %215 = arith.mulf %214, %212 : vector<1x64xf32>
    %216 = arith.mulf %206, %187 : vector<1x64xf32>
    %217 = arith.addf %215, %216 : vector<1x64xf32>
    %c6 = arith.constant 6 : index
    %c0_46 = arith.constant 0 : index
    %218 = vector.load %arg11[%c6, %c0_46] : memref<8x64xf32, #tpu.memory_space<vmem>>, vector<1x64xf32>
    tpu.vector_store %arg11[%c6, %c0_46], %217 {strides = array<i32>} : memref<8x64xf32, #tpu.memory_space<vmem>>, vector<1x64xf32>,
    %219 = vector.extract_strided_slice %5 {offsets = [7, 0], sizes = [1, 192], strides = [1, 1]} : vector<8x192xf32> to vector<1x192xf32>
    %cst_47 = arith.constant dense<0.000000e+00> : vector<1x192xf32>
    %220 = tpu.matmul %217, %6, %cst_47 {dimension_numbers = #tpu.dot_dimension_numbers<[1], [0], [0], [1], [0, 0, 1, 1], [], []>} : vector<1x64xf32>, vector<64x192xf32>, vector<1x192xf32> -> vector<1x192xf32>
    %221 = vector.extract_strided_slice %219 {offsets = [0, 0], sizes = [1, 64], strides = [1, 1]} : vector<1x192xf32> to vector<1x64xf32>
    %222 = vector.extract_strided_slice %220 {offsets = [0, 0], sizes = [1, 64], strides = [1, 1]} : vector<1x192xf32> to vector<1x64xf32>
    %223 = arith.addf %221, %222 : vector<1x64xf32>
    %224 = arith.negf %223 : vector<1x64xf32>
    %225 = math.exp %224 : vector<1x64xf32>
    %cst_48 = arith.constant 1.000000e+00 : f32
    %226 = vector.broadcast %cst_48 : f32 to vector<1x64xf32>
    %227 = arith.addf %226, %225 : vector<1x64xf32>
    %228 = arith.divf %226, %227 : vector<1x64xf32>
    %229 = vector.extract_strided_slice %219 {offsets = [0, 64], sizes = [1, 64], strides = [1, 1]} : vector<1x192xf32> to vector<1x64xf32>
    %230 = vector.extract_strided_slice %220 {offsets = [0, 64], sizes = [1, 64], strides = [1, 1]} : vector<1x192xf32> to vector<1x64xf32>
    %231 = arith.addf %229, %230 : vector<1x64xf32>
    %232 = arith.negf %231 : vector<1x64xf32>
    %233 = math.exp %232 : vector<1x64xf32>
    %cst_49 = arith.constant 1.000000e+00 : f32
    %234 = vector.broadcast %cst_49 : f32 to vector<1x64xf32>
    %235 = arith.addf %234, %233 : vector<1x64xf32>
    %236 = arith.divf %234, %235 : vector<1x64xf32>
    %237 = vector.extract_strided_slice %219 {offsets = [0, 128], sizes = [1, 64], strides = [1, 1]} : vector<1x192xf32> to vector<1x64xf32>
    %238 = vector.extract_strided_slice %220 {offsets = [0, 128], sizes = [1, 64], strides = [1, 1]} : vector<1x192xf32> to vector<1x64xf32>
    %239 = arith.addf %238, %7 : vector<1x64xf32>
    %240 = arith.mulf %228, %239 : vector<1x64xf32>
    %241 = arith.addf %237, %240 : vector<1x64xf32>
    %242 = math.tanh %241 : vector<1x64xf32>
    %cst_50 = arith.constant 1.000000e+00 : f32
    %243 = vector.broadcast %cst_50 : f32 to vector<1x64xf32>
    %244 = arith.subf %243, %236 : vector<1x64xf32>
    %245 = arith.mulf %244, %242 : vector<1x64xf32>
    %246 = arith.mulf %236, %217 : vector<1x64xf32>
    %247 = arith.addf %245, %246 : vector<1x64xf32>
    %c7 = arith.constant 7 : index
    %c0_51 = arith.constant 0 : index
    %248 = vector.load %arg11[%c7, %c0_51] : memref<8x64xf32, #tpu.memory_space<vmem>>, vector<1x64xf32>
    tpu.vector_store %arg11[%c7, %c0_51], %247 {strides = array<i32>} : memref<8x64xf32, #tpu.memory_space<vmem>>, vector<1x64xf32>,
    %c0_52 = arith.constant 0 : index
    %c0_53 = arith.constant 0 : index
    %249 = vector.load %arg10[%c0_52, %c0_53] : memref<1x64xf32, #tpu.memory_space<vmem>>, vector<1x64xf32>
    tpu.vector_store %arg10[%c0_52, %c0_53], %247 {strides = array<i32>} : memref<1x64xf32, #tpu.memory_space<vmem>>, vector<1x64xf32>,
    %c0_54 = arith.constant 0 : index
    %c0_55 = arith.constant 0 : index
    %250 = vector.load %arg11[%c0_54, %c0_55] : memref<8x64xf32, #tpu.memory_space<vmem>>, vector<8x64xf32>
    %c0_56 = arith.constant 0 : index
    %c0_57 = arith.constant 0 : index
    %251 = vector.load %arg6[%c0_56, %c0_57] : memref<64x16xf32, #tpu.memory_space<vmem>>, vector<64x16xf32>
    %cst_58 = arith.constant dense<0.000000e+00> : vector<8x16xf32>
    %252 = tpu.matmul %250, %251, %cst_58 {dimension_numbers = #tpu.dot_dimension_numbers<[1], [0], [0], [1], [0, 0, 1, 1], [], []>} : vector<8x64xf32>, vector<64x16xf32>, vector<8x16xf32> -> vector<8x16xf32>
    %c0_59 = arith.constant 0 : index
    %c0_60 = arith.constant 0 : index
    %253 = vector.load %arg7[%c0_59, %c0_60] : memref<1x16xf32, #tpu.memory_space<vmem>>, vector<1x16xf32>
    %254 = vector.broadcast %253 : vector<1x16xf32> to vector<8x16xf32>
    %255 = arith.addf %252, %254 : vector<8x16xf32>
    %c0_61 = arith.constant 0 : index
    %c0_62 = arith.constant 0 : index
    %256 = vector.load %arg8[%c0_61, %c0_62] : memref<1x16xf32, #tpu.memory_space<vmem>>, vector<1x16xf32>
    %cst_63 = arith.constant 0.000000e+00 : f32
    %257 = vector.broadcast %cst_63 : f32 to vector<1x16xf32>
    %258 = arith.cmpf one, %256, %257 : vector<1x16xf32>
    %cst_64 = arith.constant -1.000000e+09 : f32
    %259 = vector.shape_cast %258 : vector<1x16xi1> to vector<1x16xi1>
    %260 = vector.broadcast %259 : vector<1x16xi1> to vector<8x16xi1>
    %261 = vector.broadcast %cst_64 : f32 to vector<8x16xf32>
    %262 = arith.select %260, %255, %261 : vector<8x16xi1>, vector<8x16xf32>
    %c0_65 = arith.constant 0 : index
    %c0_66 = arith.constant 0 : index
    %263 = vector.load %arg9[%c0_65, %c0_66] : memref<8x16xf32, #tpu.memory_space<vmem>>, vector<8x16xf32>
    tpu.vector_store %arg9[%c0_65, %c0_66], %262 {strides = array<i32>} : memref<8x16xf32, #tpu.memory_space<vmem>>, vector<8x16xf32>,
    return
  }
}

</mosaic_0001>

<llo_original>
// kernel: tpu_custom_call.1
$region0: #{tpu_custom_call.1}
  #allocation0 [shape = 'u32[]', space=smem, size = 0x4, offset = 0x4, fixed_abs, tag = 'smem constant byte address 0x4 - core index']
  #allocation1 [shape = 'u32[144,128]{1,0:T(1,128)}', space=vmem, size = 0x12000, scoped, tag = 'internal scratch']
  #allocation2 [shape = 'f32[8,64]{1,0:T(8,128)}', space=vmem, size = 0x1000, scoped, tag = 'scratch operand']
  %s0 = inlined_call_operand.vmem [shape: f32[8,8], index: 0, kind: input, shape index: {}]
  %s1 = inlined_call_operand.vmem [shape: f32[1,64], index: 1, kind: input, shape index: {}]
  %s2 = inlined_call_operand.vmem [shape: f32[8,192], index: 2, kind: input, shape index: {}]
  %s3 = inlined_call_operand.vmem [shape: f32[1,192], index: 3, kind: input, shape index: {}]
  %s4 = inlined_call_operand.hbm [shape: f32[64,192], index: 4, kind: input, shape index: {}]
  %s5 = inlined_call_operand.vmem [shape: f32[1,64], index: 5, kind: input, shape index: {}]
  %s6 = inlined_call_operand.vmem [shape: f32[64,16], index: 6, kind: input, shape index: {}]
  %s7 = inlined_call_operand.vmem [shape: f32[1,16], index: 7, kind: input, shape index: {}]
  %s8 = inlined_call_operand.vmem [shape: f32[1,16], index: 8, kind: input, shape index: {}]
  %s9 = inlined_call_operand.hbm [shape: f32[8,16], index: 9, kind: output, shape index: {0}]
  %s10 = inlined_call_operand.hbm [shape: f32[1,64], index: 10, kind: output, shape index: {1}]
  %11 = xla_tuple %s9, %s10
  %s12 = sld [smem:[#allocation0]]
  $region58: #{tpu_custom_call.1} parent=0
    _
  %s14 = ssub.s32 1, %s12
  %s15 = scalar_select 0, %s14, %s12
  $region1: #{tpu_custom_call.1} parent=0
    #allocation3 [shape = 'u8[65536]{0}', space=vmem, size = 0x10000, scoped, tag = 'input window, operand 4, single buffered']
    #allocation4 [shape = 's32[1]{0}', space=sflag, size = 0x4, scoped, tag = 'scoped memory for tpu_custom_call.1']
    #allocation5 [shape = 's32[1]{0}', space=sflag, size = 0x4, scoped, tag = 'scoped memory for tpu_custom_call.1']
    #allocation6 [shape = 'u8[4096]{0}', space=vmem, size = 0x1000, scoped, tag = 'output window, operand 0, single buffered']
    #allocation7 [shape = 'u8[512]{0}', space=vmem, size = 0x400, scoped, tag = 'output window, operand 1, single buffered']
    #allocation8 [shape = 's32[1]{0}', space=sflag, size = 0x4, scoped, tag = 'scoped memory for tpu_custom_call.1']
    %16 = vsyncpa [#allocation4], 0
    %17 = vsyncpa [#allocation5], 0
    %18 = vsyncpa [#allocation8], 0
    // Predicated region
    $region2: #{tpu_custom_call.1} parent=1 // pred_check
      _
    $region3: #{tpu_custom_call.1} parent=1 // pred_check_branch
      %20 = sbr.rel (0) target = $region5
    $region4: #{tpu_custom_call.1} parent=1 // pred_region
      _
    $region5: #{tpu_custom_call.1} parent=1 // pred_fallthru
      _
    // Predicated region
    $region6: #{tpu_custom_call.1} parent=1 // pred_check
      _
    $region7: #{tpu_custom_call.1} parent=1 // pred_check_branch
      %22 = sbr.rel (0) target = $region9
    $region8: #{tpu_custom_call.1} parent=1 // pred_region
      _
    $region9: #{tpu_custom_call.1} parent=1 // pred_fallthru
      _
    // Predicated region
    $region10: #{tpu_custom_call.1} parent=1 // pred_check
      _
    $region11: #{tpu_custom_call.1} parent=1 // pred_check_branch
      %24 = sbr.rel (0) target = $region13
    $region12: #{tpu_custom_call.1} parent=1 // pred_region
      _
    $region13: #{tpu_custom_call.1} parent=1 // pred_fallthru
      _
    // Predicated region
    $region14: #{tpu_custom_call.1} parent=1 // pred_check
      _
    $region15: #{tpu_custom_call.1} parent=1 // pred_check_branch
      %26 = sbr.rel (0) target = $region17
    $region16: #{tpu_custom_call.1} parent=1 // pred_region
      _
    $region17: #{tpu_custom_call.1} parent=1 // pred_fallthru
      _
    // Predicated region
    $region18: #{tpu_custom_call.1} parent=1 // pred_check
      _
    $region19: #{tpu_custom_call.1} parent=1 // pred_check_branch
      %28 = sbr.rel (0) target = $region21
    $region20: #{tpu_custom_call.1} parent=1 // pred_region
      %s30 = ssub.s32 2048, 2048
      %31 = vsyncadd [#allocation4], %s30
      %s32 = sshll.u32 [#allocation3], 4
      %s33 = int_to_ptr.vmem [resolvable:$true] %s32
      %38 = dma.hbm_to_vmem [thread:$0]  %s4, 2048, %s33, [#allocation4], 256, 256, 16
    $region21: #{tpu_custom_call.1} parent=1 // pred_fallthru
      _
    // Predicated region
    $region22: #{tpu_custom_call.1} parent=1 // pred_check
      _
    $region23: #{tpu_custom_call.1} parent=1 // pred_check_branch
      %40 = sbr.rel (0) target = $region25
    $region24: #{tpu_custom_call.1} parent=1 // pred_region
      _
    $region25: #{tpu_custom_call.1} parent=1 // pred_fallthru
      _
    // Predicated region
    $region26: #{tpu_custom_call.1} parent=1 // pred_check
      _
    $region27: #{tpu_custom_call.1} parent=1 // pred_check_branch
      %42 = sbr.rel (0) target = $region29
    $region28: #{tpu_custom_call.1} parent=1 // pred_region
      _
    $region29: #{tpu_custom_call.1} parent=1 // pred_fallthru
      _
    // Predicated region
    $region30: #{tpu_custom_call.1} parent=1 // pred_check
      _
    $region31: #{tpu_custom_call.1} parent=1 // pred_check_branch
      %44 = sbr.rel (0) target = $region33
    $region32: #{tpu_custom_call.1} parent=1 // pred_region
      _
    $region33: #{tpu_custom_call.1} parent=1 // pred_fallthru
      _
    // Predicated region
    $region34: #{tpu_custom_call.1} parent=1 // pred_check
      _
    $region35: #{tpu_custom_call.1} parent=1 // pred_check_branch
      %46 = sbr.rel (0) target = $region37
    $region36: #{tpu_custom_call.1} parent=1 // pred_region
      _
    $region37: #{tpu_custom_call.1} parent=1 // pred_fallthru
      _
    // Predicated region
    $region38: #{tpu_custom_call.1} parent=1 // pred_check
      _
    $region39: #{tpu_custom_call.1} parent=1 // pred_check_branch
      %48 = sbr.rel (0) target = $region41
    $region40: #{tpu_custom_call.1} parent=1 // pred_region
      %49 = dma.done [#allocation4], 2048
    $region41: #{tpu_custom_call.1} parent=1 // pred_fallthru
      _
    %v50 = vld [vmem:[%s0] sm:$0xff]
    %v51 = vld [vmem:[%s2] sm:$0xff]
    %v52 = vld [vmem:[%s2 + $0x8] sm:$0xff]
    %v53 = vld [vmem:[%s3] sm:$0x3]
    %v55 = vlaneseq
    %v56 = vshrl.u32 %v55, 7
    %v57 = vsub.s32 0, %v56
    %v58 = vrot.slane %v53, %v57
    %v59 = vlaneseq
    %v60 = vshrl.u32 %v59, 7
    %v61 = vsub.s32 1, %v60
    %v62 = vrot.slane %v53, %v61
    %vm65 = vcmask 64512
    %v67 = vsel %vm65, %v50, 0
    %69 = vmatprep.subr.mxu0 %v52
    %70 = vmatpush1.msra.mxu0 %v51
    %71 = vmatprep.subr.mxu0 0.0
    %72 = vmatpush1.msra.mxu0 0.0
    %73 = vmatprep.subr.mxu0 0.0
    %74 = vmatpush1.msra.mxu0 0.0
    %75 = vmatprep.subr.mxu0 0.0
    %76 = vmatpush1.msra.mxu0 0.0
    %77 = vmatprep.subr.mxu0 0.0
    %78 = vmatpush1.msra.mxu0 0.0
    %79 = vmatprep.subr.mxu0 0.0
    %80 = vmatpush1.msra.mxu0 0.0
    %81 = vmatprep.subr.mxu0 0.0
    %82 = vmatpush1.msra.mxu0 0.0
    %83 = vmatprep.subr.mxu0 0.0
    %84 = vmatpush1.msra.mxu0 0.0
    %85 = vmatprep.subr.mxu0 0.0
    %86 = vmatpush1.msra.mxu0 0.0
    %87 = vmatprep.subr.mxu0 0.0
    %88 = vmatpush1.msra.mxu0 0.0
    %89 = vmatprep.subr.mxu0 0.0
    %90 = vmatpush1.msra.mxu0 0.0
    %91 = vmatprep.subr.mxu0 0.0
    %92 = vmatpush1.msra.mxu0 0.0
    %93 = vmatprep.subr.mxu0 0.0
    %94 = vmatpush1.msra.mxu0 0.0
    %95 = vmatprep.subr.mxu0 0.0
    %96 = vmatpush1.msra.mxu0 0.0
    %97 = vmatprep.subr.mxu0 0.0
    %98 = vmatpush1.msra.mxu0 0.0
    %99 = vmatprep.subr.mxu0 0.0
    %100 = vmatpush1.msra.mxu0 0.0
    %101 = vmatprep.subr.mxu0 0.0
    %102 = vmatpush1.msra.mxu0 0.0
    %103 = vmatprep.subr.mxu0 0.0
    %104 = vmatpush1.msra.mxu0 0.0
    %105 = vmatprep.subr.mxu0 0.0
    %106 = vmatpush1.msra.mxu0 0.0
    %107 = vmatprep.subr.mxu0 0.0
    %108 = vmatpush1.msra.mxu0 0.0
    %109 = vmatprep.subr.mxu0 0.0
    %110 = vmatpush1.msra.mxu0 0.0
    %111 = vmatprep.subr.mxu0 0.0
    %112 = vmatpush1.msra.mxu0 0.0
    %113 = vmatprep.subr.mxu0 0.0
    %114 = vmatpush1.msra.mxu0 0.0
    %115 = vmatprep.subr.mxu0 0.0
    %116 = vmatpush1.msra.mxu0 0.0
    %117 = vmatprep.subr.mxu0 0.0
    %118 = vmatpush1.msra.mxu0 0.0
    %119 = vmatprep.subr.mxu0 0.0
    %120 = vmatpush1.msra.mxu0 0.0
    %121 = vmatprep.subr.mxu0 0.0
    %122 = vmatpush1.msra.mxu0 0.0
    %123 = vmatprep.subr.mxu0 0.0
    %124 = vmatpush1.msra.mxu0 0.0
    %125 = vmatprep.subr.mxu0 0.0
    %126 = vmatpush1.msra.mxu0 0.0
    %127 = vmatprep.subr.mxu0 0.0
    %128 = vmatpush1.msra.mxu0 0.0
    %129 = vmatprep.subr.mxu0 0.0
    %130 = vmatpush1.msra.mxu0 0.0
    %131 = vmatprep.subr.mxu0 0.0
    %132 = vmatpush1.msra.mxu0 0.0
    %133 = vmatprep.mubr.f32.mxu0 0.0
    %134 = vmatmul.mubr.f32.gmra.mrb[0].mxu0 %v67
    %v135 = vpop.f32.mrb[0].mxu0
    %v136 = vadd.f32 %v58, %v135
    %v137 = vpop.f32.mrb[0].mxu0
    %v138 = vadd.f32 %v62, %v137
    %139 = vdwg.mxu0
    %v140 = vld [vmem:[#allocation3] sm:$0xff]
    %v141 = vld [vmem:[#allocation3 + $0x8] sm:$0xff]
    %v142 = vld [vmem:[#allocation3 + $0x10] sm:$0xff]
    %v143 = vld [vmem:[#allocation3 + $0x18] sm:$0xff]
    %v144 = vld [vmem:[#allocation3 + $0x20] sm:$0xff]
    %v145 = vld [vmem:[#allocation3 + $0x28] sm:$0xff]
    %v146 = vld [vmem:[#allocation3 + $0x30] sm:$0xff]
    %v147 = vld [vmem:[#allocation3 + $0x38] sm:$0xff]
    %v148 = vld [vmem:[#allocation3 + $0x40] sm:$0xff]
    %v149 = vld [vmem:[#allocation3 + $0x48] sm:$0xff]
    %v150 = vld [vmem:[#allocation3 + $0x50] sm:$0xff]
    %v151 = vld [vmem:[#allocation3 + $0x58] sm:$0xff]
    %v152 = vld [vmem:[#allocation3 + $0x60] sm:$0xff]
    %v153 = vld [vmem:[#allocation3 + $0x68] sm:$0xff]
    %v154 = vld [vmem:[#allocation3 + $0x70] sm:$0xff]
    %v155 = vld [vmem:[#allocation3 + $0x78] sm:$0xff]
    %v156 = vld [vmem:[%s5] sm:$0x1]
    %v157 = vld [vmem:[%s1] sm:$0x1]
    %vm158 = vcmask 523264
    %v160 = vsel %vm158, %v157, 0
    %162 = vmatprep.subr.mxu0 %v141
    %163 = vmatpush1.msra.mxu0 %v140
    %164 = vmatprep.subr.mxu0 %v143
    %165 = vmatpush1.msra.mxu0 %v142
    %166 = vmatprep.subr.mxu0 %v145
    %167 = vmatpush1.msra.mxu0 %v144
    %168 = vmatprep.subr.mxu0 %v147
    %169 = vmatpush1.msra.mxu0 %v146
    %170 = vmatprep.subr.mxu0 %v149
    %171 = vmatpush1.msra.mxu0 %v148
    %172 = vmatprep.subr.mxu0 %v151
    %173 = vmatpush1.msra.mxu0 %v150
    %174 = vmatprep.subr.mxu0 %v153
    %175 = vmatpush1.msra.mxu0 %v152
    %176 = vmatprep.subr.mxu0 %v155
    %177 = vmatpush1.msra.mxu0 %v154
    %178 = vmatprep.subr.mxu0 0.0
    %179 = vmatpush1.msra.mxu0 0.0
    %180 = vmatprep.subr.mxu0 0.0
    %181 = vmatpush1.msra.mxu0 0.0
    %182 = vmatprep.subr.mxu0 0.0
    %183 = vmatpush1.msra.mxu0 0.0
    %184 = vmatprep.subr.mxu0 0.0
    %185 = vmatpush1.msra.mxu0 0.0
    %186 = vmatprep.subr.mxu0 0.0
    %187 = vmatpush1.msra.mxu0 0.0
    %188 = vmatprep.subr.mxu0 0.0
    %189 = vmatpush1.msra.mxu0 0.0
    %190 = vmatprep.subr.mxu0 0.0
    %191 = vmatpush1.msra.mxu0 0.0
    %192 = vmatprep.subr.mxu0 0.0
    %193 = vmatpush1.msra.mxu0 0.0
    %194 = vmatprep.subr.mxu0 0.0
    %195 = vmatpush1.msra.mxu0 0.0
    %196 = vmatprep.subr.mxu0 0.0
    %197 = vmatpush1.msra.mxu0 0.0
    %198 = vmatprep.subr.mxu0 0.0
    %199 = vmatpush1.msra.mxu0 0.0
    %200 = vmatprep.subr.mxu0 0.0
    %201 = vmatpush1.msra.mxu0 0.0
    %202 = vmatprep.subr.mxu0 0.0
    %203 = vmatpush1.msra.mxu0 0.0
    %204 = vmatprep.subr.mxu0 0.0
    %205 = vmatpush1.msra.mxu0 0.0
    %206 = vmatprep.subr.mxu0 0.0
    %207 = vmatpush1.msra.mxu0 0.0
    %208 = vmatprep.subr.mxu0 0.0
    %209 = vmatpush1.msra.mxu0 0.0
    %210 = vmatprep.subr.mxu0 0.0
    %211 = vmatpush1.msra.mxu0 0.0
    %212 = vmatprep.subr.mxu0 0.0
    %213 = vmatpush1.msra.mxu0 0.0
    %214 = vmatprep.subr.mxu0 0.0
    %215 = vmatpush1.msra.mxu0 0.0
    %216 = vmatprep.subr.mxu0 0.0
    %217 = vmatpush1.msra.mxu0 0.0
    %218 = vmatprep.subr.mxu0 0.0
    %219 = vmatpush1.msra.mxu0 0.0
    %220 = vmatprep.subr.mxu0 0.0
    %221 = vmatpush1.msra.mxu0 0.0
    %222 = vmatprep.subr.mxu0 0.0
    %223 = vmatpush1.msra.mxu0 0.0
    %224 = vmatprep.subr.mxu0 0.0
    %225 = vmatpush1.msra.mxu0 0.0
    %226 = vmatprep.mubr.f32.mxu0 0.0
    %227 = vmatmul.mubr.f32.gmra.mrb[0].mxu0 %v160
    %v228 = vpop.f32.mrb[0].mxu0
    %v229 = vadd.f32 0.0, %v228
    %v230 = vpop.f32.mrb[0].mxu0
    %v231 = vadd.f32 0.0, %v230
    %232 = vdwg.mxu0
    %v233 = vadd.f32 %v136, %v229
    %v234 = vxor.u32 %v233, 2147483648
    %v235 = vmul.f32 %v234, 1.442695
    %v236 = vpow.pop %v235
    %v237 = vadd.f32 %v236, 1.0
    %v238 = vrcp.pop %v237
    %v239 = vmul.f32 1.0, %v238
    %v240 = vadd.f32 %v231, %v156
    %v241 = vmul.f32 %v239, %v240
    %v242 = vadd.f32 %v138, %v241
    %v243 = vtanh.pop %v242
    %v244 = vsub.f32 1.0, %v239
    %246 = vrot.lane.b32.xlu0 %v243, 64
    %v247 = vpop.permute.xlu0 %246
    %v249 = vmul.f32 %v244, %v247
    %v250 = vlaneseq
    %v251 = vshrl.u32 %v250, 7
    %v252 = vsub.s32 0, %v251
    %v253 = vrot.slane %v157, %v252
    %254 = vrot.lane.b32.xlu0 %v253, 64
    %v255 = vpop.permute.xlu0 %254
    %v257 = vmul.f32 %v239, %v255
    %v258 = vadd.f32 %v249, %v257
    %260 = vrot.lane.b32.xlu0 %v258, 64
    %v261 = vpop.permute.xlu0 %260
    %vm263 = vcmask 516096
    %264 = vst.msk [vmem:[#allocation2] sm:$0x1] %vm263, %v261
    %v265 = vsel %vm158, %v261, 0
    %267 = vmatprep.subr.mxu0 %v141
    %268 = vmatpush1.msra.mxu0 %v140
    %269 = vmatprep.subr.mxu0 %v143
    %270 = vmatpush1.msra.mxu0 %v142
    %271 = vmatprep.subr.mxu0 %v145
    %272 = vmatpush1.msra.mxu0 %v144
    %273 = vmatprep.subr.mxu0 %v147
    %274 = vmatpush1.msra.mxu0 %v146
    %275 = vmatprep.subr.mxu0 %v149
    %276 = vmatpush1.msra.mxu0 %v148
    %277 = vmatprep.subr.mxu0 %v151
    %278 = vmatpush1.msra.mxu0 %v150
    %279 = vmatprep.subr.mxu0 %v153
    %280 = vmatpush1.msra.mxu0 %v152
    %281 = vmatprep.subr.mxu0 %v155
    %282 = vmatpush1.msra.mxu0 %v154
    %283 = vmatprep.subr.mxu0 0.0
    %284 = vmatpush1.msra.mxu0 0.0
    %285 = vmatprep.subr.mxu0 0.0
    %286 = vmatpush1.msra.mxu0 0.0
    %287 = vmatprep.subr.mxu0 0.0
    %288 = vmatpush1.msra.mxu0 0.0
    %289 = vmatprep.subr.mxu0 0.0
    %290 = vmatpush1.msra.mxu0 0.0
    %291 = vmatprep.subr.mxu0 0.0
    %292 = vmatpush1.msra.mxu0 0.0
    %293 = vmatprep.subr.mxu0 0.0
    %294 = vmatpush1.msra.mxu0 0.0
    %295 = vmatprep.subr.mxu0 0.0
    %296 = vmatpush1.msra.mxu0 0.0
    %297 = vmatprep.subr.mxu0 0.0
    %298 = vmatpush1.msra.mxu0 0.0
    %299 = vmatprep.subr.mxu0 0.0
    %300 = vmatpush1.msra.mxu0 0.0
    %301 = vmatprep.subr.mxu0 0.0
    %302 = vmatpush1.msra.mxu0 0.0
    %303 = vmatprep.subr.mxu0 0.0
    %304 = vmatpush1.msra.mxu0 0.0
    %305 = vmatprep.subr.mxu0 0.0
    %306 = vmatpush1.msra.mxu0 0.0
    %307 = vmatprep.subr.mxu0 0.0
    %308 = vmatpush1.msra.mxu0 0.0
    %309 = vmatprep.subr.mxu0 0.0
    %310 = vmatpush1.msra.mxu0 0.0
    %311 = vmatprep.subr.mxu0 0.0
    %312 = vmatpush1.msra.mxu0 0.0
    %313 = vmatprep.subr.mxu0 0.0
    %314 = vmatpush1.msra.mxu0 0.0
    %315 = vmatprep.subr.mxu0 0.0
    %316 = vmatpush1.msra.mxu0 0.0
    %317 = vmatprep.subr.mxu0 0.0
    %318 = vmatpush1.msra.mxu0 0.0
    %319 = vmatprep.subr.mxu0 0.0
    %320 = vmatpush1.msra.mxu0 0.0
    %321 = vmatprep.subr.mxu0 0.0
    %322 = vmatpush1.msra.mxu0 0.0
    %323 = vmatprep.subr.mxu0 0.0
    %324 = vmatpush1.msra.mxu0 0.0
    %325 = vmatprep.subr.mxu0 0.0
    %326 = vmatpush1.msra.mxu0 0.0
    %327 = vmatprep.subr.mxu0 0.0
    %328 = vmatpush1.msra.mxu0 0.0
    %329 = vmatprep.subr.mxu0 0.0
    %330 = vmatpush1.msra.mxu0 0.0
    %331 = vmatprep.mubr.f32.mxu0 0.0
    %332 = vmatmul.mubr.f32.gmra.mrb[0].mxu0 %v265
    %v333 = vpop.f32.mrb[0].mxu0
    %v334 = vadd.f32 0.0, %v333
    %v335 = vpop.f32.mrb[0].mxu0
    %v336 = vadd.f32 0.0, %v335
    %337 = vdwg.mxu0
    %v339 = vrot.slane %v334, 7
    %v341 = vadd.f32 %v136, %v339
    %v342 = vxor.u32 %v341, 2147483648
    %v343 = vmul.f32 %v342, 1.442695
    %v344 = vpow.pop %v343
    %v345 = vadd.f32 %v344, 1.0
    %v346 = vrcp.pop %v345
    %v347 = vmul.f32 1.0, %v346
    %v348 = vadd.f32 %v336, %v156
    %v350 = vrot.slane %v348, 7
    %v352 = vmul.f32 %v347, %v350
    %v353 = vadd.f32 %v138, %v352
    %v354 = vtanh.pop %v353
    %v355 = vsub.f32 1.0, %v347
    %357 = vrot.lane.b32.xlu0 %v354, 64
    %v358 = vpop.permute.xlu0 %357
    %v360 = vmul.f32 %v355, %v358
    %v361 = vrot.slane %v258, 7
    %v363 = vmul.f32 %v347, %v361
    %v364 = vadd.f32 %v360, %v363
    %366 = vrot.lane.b32.xlu0 %v364, 64
    %v367 = vpop.permute.xlu0 %366
    %vm369 = vcmask 517121
    %370 = vst.msk [vmem:[#allocation2] sm:$0x2] %vm369, %v367
    %v371 = vrot.slane %v364, 1
    %372 = vrot.lane.b32.xlu0 %v371, 64
    %v373 = vpop.permute.xlu0 %372
    %v374 = vsel %vm158, %v373, 0
    %376 = vmatprep.subr.mxu0 %v141
    %377 = vmatpush1.msra.mxu0 %v140
    %378 = vmatprep.subr.mxu0 %v143
    %379 = vmatpush1.msra.mxu0 %v142
    %380 = vmatprep.subr.mxu0 %v145
    %381 = vmatpush1.msra.mxu0 %v144
    %382 = vmatprep.subr.mxu0 %v147
    %383 = vmatpush1.msra.mxu0 %v146
    %384 = vmatprep.subr.mxu0 %v149
    %385 = vmatpush1.msra.mxu0 %v148
    %386 = vmatprep.subr.mxu0 %v151
    %387 = vmatpush1.msra.mxu0 %v150
    %388 = vmatprep.subr.mxu0 %v153
    %389 = vmatpush1.msra.mxu0 %v152
    %390 = vmatprep.subr.mxu0 %v155
    %391 = vmatpush1.msra.mxu0 %v154
    %392 = vmatprep.subr.mxu0 0.0
    %393 = vmatpush1.msra.mxu0 0.0
    %394 = vmatprep.subr.mxu0 0.0
    %395 = vmatpush1.msra.mxu0 0.0
    %396 = vmatprep.subr.mxu0 0.0
    %397 = vmatpush1.msra.mxu0 0.0
    %398 = vmatprep.subr.mxu0 0.0
    %399 = vmatpush1.msra.mxu0 0.0
    %400 = vmatprep.subr.mxu0 0.0
    %401 = vmatpush1.msra.mxu0 0.0
    %402 = vmatprep.subr.mxu0 0.0
    %403 = vmatpush1.msra.mxu0 0.0
    %404 = vmatprep.subr.mxu0 0.0
    %405 = vmatpush1.msra.mxu0 0.0
    %406 = vmatprep.subr.mxu0 0.0
    %407 = vmatpush1.msra.mxu0 0.0
    %408 = vmatprep.subr.mxu0 0.0
    %409 = vmatpush1.msra.mxu0 0.0
    %410 = vmatprep.subr.mxu0 0.0
    %411 = vmatpush1.msra.mxu0 0.0
    %412 = vmatprep.subr.mxu0 0.0
    %413 = vmatpush1.msra.mxu0 0.0
    %414 = vmatprep.subr.mxu0 0.0
    %415 = vmatpush1.msra.mxu0 0.0
    %416 = vmatprep.subr.mxu0 0.0
    %417 = vmatpush1.msra.mxu0 0.0
    %418 = vmatprep.subr.mxu0 0.0
    %419 = vmatpush1.msra.mxu0 0.0
    %420 = vmatprep.subr.mxu0 0.0
    %421 = vmatpush1.msra.mxu0 0.0
    %422 = vmatprep.subr.mxu0 0.0
    %423 = vmatpush1.msra.mxu0 0.0
    %424 = vmatprep.subr.mxu0 0.0
    %425 = vmatpush1.msra.mxu0 0.0
    %426 = vmatprep.subr.mxu0 0.0
    %427 = vmatpush1.msra.mxu0 0.0
    %428 = vmatprep.subr.mxu0 0.0
    %429 = vmatpush1.msra.mxu0 0.0
    %430 = vmatprep.subr.mxu0 0.0
    %431 = vmatpush1.msra.mxu0 0.0
    %432 = vmatprep.subr.mxu0 0.0
    %433 = vmatpush1.msra.mxu0 0.0
    %434 = vmatprep.subr.mxu0 0.0
    %435 = vmatpush1.msra.mxu0 0.0
    %436 = vmatprep.subr.mxu0 0.0
    %437 = vmatpush1.msra.mxu0 0.0
    %438 = vmatprep.subr.mxu0 0.0
    %439 = vmatpush1.msra.mxu0 0.0
    %440 = vmatprep.mubr.f32.mxu0 0.0
    %441 = vmatmul.mubr.f32.gmra.mrb[0].mxu0 %v374
    %v442 = vpop.f32.mrb[0].mxu0
    %v443 = vadd.f32 0.0, %v442
    %v444 = vpop.f32.mrb[0].mxu0
    %v445 = vadd.f32 0.0, %v444
    %446 = vdwg.mxu0
    %v448 = vrot.slane %v443, 6
    %v450 = vadd.f32 %v136, %v448
    %v451 = vxor.u32 %v450, 2147483648
    %v452 = vmul.f32 %v451, 1.442695
    %v453 = vpow.pop %v452
    %v454 = vadd.f32 %v453, 1.0
    %v455 = vrcp.pop %v454
    %v456 = vmul.f32 1.0, %v455
    %v457 = vadd.f32 %v445, %v156
    %v459 = vrot.slane %v457, 6
    %v461 = vmul.f32 %v456, %v459
    %v462 = vadd.f32 %v138, %v461
    %v463 = vtanh.pop %v462
    %v464 = vsub.f32 1.0, %v456
    %466 = vrot.lane.b32.xlu0 %v463, 64
    %v467 = vpop.permute.xlu0 %466
    %v469 = vmul.f32 %v464, %v467
    %v470 = vrot.slane %v364, 7
    %v472 = vmul.f32 %v456, %v470
    %v473 = vadd.f32 %v469, %v472
    %475 = vrot.lane.b32.xlu0 %v473, 64
    %v476 = vpop.permute.xlu0 %475
    %vm478 = vcmask 518146
    %479 = vst.msk [vmem:[#allocation2] sm:$0x4] %vm478, %v476
    %v480 = vrot.slane %v473, 2
    %481 = vrot.lane.b32.xlu0 %v480, 64
    %v482 = vpop.permute.xlu0 %481
    %v483 = vsel %vm158, %v482, 0
    %485 = vmatprep.subr.mxu0 %v141
    %486 = vmatpush1.msra.mxu0 %v140
    %487 = vmatprep.subr.mxu0 %v143
    %488 = vmatpush1.msra.mxu0 %v142
    %489 = vmatprep.subr.mxu0 %v145
    %490 = vmatpush1.msra.mxu0 %v144
    %491 = vmatprep.subr.mxu0 %v147
    %492 = vmatpush1.msra.mxu0 %v146
    %493 = vmatprep.subr.mxu0 %v149
    %494 = vmatpush1.msra.mxu0 %v148
    %495 = vmatprep.subr.mxu0 %v151
    %496 = vmatpush1.msra.mxu0 %v150
    %497 = vmatprep.subr.mxu0 %v153
    %498 = vmatpush1.msra.mxu0 %v152
    %499 = vmatprep.subr.mxu0 %v155
    %500 = vmatpush1.msra.mxu0 %v154
    %501 = vmatprep.subr.mxu0 0.0
    %502 = vmatpush1.msra.mxu0 0.0
    %503 = vmatprep.subr.mxu0 0.0
    %504 = vmatpush1.msra.mxu0 0.0
    %505 = vmatprep.subr.mxu0 0.0
    %506 = vmatpush1.msra.mxu0 0.0
    %507 = vmatprep.subr.mxu0 0.0
    %508 = vmatpush1.msra.mxu0 0.0
    %509 = vmatprep.subr.mxu0 0.0
    %510 = vmatpush1.msra.mxu0 0.0
    %511 = vmatprep.subr.mxu0 0.0
    %512 = vmatpush1.msra.mxu0 0.0
    %513 = vmatprep.subr.mxu0 0.0
    %514 = vmatpush1.msra.mxu0 0.0
    %515 = vmatprep.subr.mxu0 0.0
    %516 = vmatpush1.msra.mxu0 0.0
    %517 = vmatprep.subr.mxu0 0.0
    %518 = vmatpush1.msra.mxu0 0.0
    %519 = vmatprep.subr.mxu0 0.0
    %520 = vmatpush1.msra.mxu0 0.0
    %521 = vmatprep.subr.mxu0 0.0
    %522 = vmatpush1.msra.mxu0 0.0
    %523 = vmatprep.subr.mxu0 0.0
    %524 = vmatpush1.msra.mxu0 0.0
    %525 = vmatprep.subr.mxu0 0.0
    %526 = vmatpush1.msra.mxu0 0.0
    %527 = vmatprep.subr.mxu0 0.0
    %528 = vmatpush1.msra.mxu0 0.0
    %529 = vmatprep.subr.mxu0 0.0
    %530 = vmatpush1.msra.mxu0 0.0
    %531 = vmatprep.subr.mxu0 0.0
    %532 = vmatpush1.msra.mxu0 0.0
    %533 = vmatprep.subr.mxu0 0.0
    %534 = vmatpush1.msra.mxu0 0.0
    %535 = vmatprep.subr.mxu0 0.0
    %536 = vmatpush1.msra.mxu0 0.0
    %537 = vmatprep.subr.mxu0 0.0
    %538 = vmatpush1.msra.mxu0 0.0
    %539 = vmatprep.subr.mxu0 0.0
    %540 = vmatpush1.msra.mxu0 0.0
    %541 = vmatprep.subr.mxu0 0.0
    %542 = vmatpush1.msra.mxu0 0.0
    %543 = vmatprep.subr.mxu0 0.0
    %544 = vmatpush1.msra.mxu0 0.0
    %545 = vmatprep.subr.mxu0 0.0
    %546 = vmatpush1.msra.mxu0 0.0
    %547 = vmatprep.subr.mxu0 0.0
    %548 = vmatpush1.msra.mxu0 0.0
    %549 = vmatprep.mubr.f32.mxu0 0.0
    %550 = vmatmul.mubr.f32.gmra.mrb[0].mxu0 %v483
    %v551 = vpop.f32.mrb[0].mxu0
    %v552 = vadd.f32 0.0, %v551
    %v553 = vpop.f32.mrb[0].mxu0
    %v554 = vadd.f32 0.0, %v553
    %555 = vdwg.mxu0
    %v557 = vrot.slane %v552, 5
    %v559 = vadd.f32 %v136, %v557
    %v560 = vxor.u32 %v559, 2147483648
    %v561 = vmul.f32 %v560, 1.442695
    %v562 = vpow.pop %v561
    %v563 = vadd.f32 %v562, 1.0
    %v564 = vrcp.pop %v563
    %v565 = vmul.f32 1.0, %v564
    %v566 = vadd.f32 %v554, %v156
    %v568 = vrot.slane %v566, 5
    %v570 = vmul.f32 %v565, %v568
    %v571 = vadd.f32 %v138, %v570
    %v572 = vtanh.pop %v571
    %v573 = vsub.f32 1.0, %v565
    %575 = vrot.lane.b32.xlu0 %v572, 64
    %v576 = vpop.permute.xlu0 %575
    %v578 = vmul.f32 %v573, %v576
    %v579 = vrot.slane %v473, 7
    %v581 = vmul.f32 %v565, %v579
    %v582 = vadd.f32 %v578, %v581
    %584 = vrot.lane.b32.xlu0 %v582, 64
    %v585 = vpop.permute.xlu0 %584
    %vm587 = vcmask 519171
    %588 = vst.msk [vmem:[#allocation2] sm:$0x8] %vm587, %v585
    %v589 = vrot.slane %v582, 3
    %590 = vrot.lane.b32.xlu0 %v589, 64
    %v591 = vpop.permute.xlu0 %590
    %v592 = vsel %vm158, %v591, 0
    %594 = vmatprep.subr.mxu0 %v141
    %595 = vmatpush1.msra.mxu0 %v140
    %596 = vmatprep.subr.mxu0 %v143
    %597 = vmatpush1.msra.mxu0 %v142
    %598 = vmatprep.subr.mxu0 %v145
    %599 = vmatpush1.msra.mxu0 %v144
    %600 = vmatprep.subr.mxu0 %v147
    %601 = vmatpush1.msra.mxu0 %v146
    %602 = vmatprep.subr.mxu0 %v149
    %603 = vmatpush1.msra.mxu0 %v148
    %604 = vmatprep.subr.mxu0 %v151
    %605 = vmatpush1.msra.mxu0 %v150
    %606 = vmatprep.subr.mxu0 %v153
    %607 = vmatpush1.msra.mxu0 %v152
    %608 = vmatprep.subr.mxu0 %v155
    %609 = vmatpush1.msra.mxu0 %v154
    %610 = vmatprep.subr.mxu0 0.0
    %611 = vmatpush1.msra.mxu0 0.0
    %612 = vmatprep.subr.mxu0 0.0
    %613 = vmatpush1.msra.mxu0 0.0
    %614 = vmatprep.subr.mxu0 0.0
    %615 = vmatpush1.msra.mxu0 0.0
    %616 = vmatprep.subr.mxu0 0.0
    %617 = vmatpush1.msra.mxu0 0.0
    %618 = vmatprep.subr.mxu0 0.0
    %619 = vmatpush1.msra.mxu0 0.0
    %620 = vmatprep.subr.mxu0 0.0
    %621 = vmatpush1.msra.mxu0 0.0
    %622 = vmatprep.subr.mxu0 0.0
    %623 = vmatpush1.msra.mxu0 0.0
    %624 = vmatprep.subr.mxu0 0.0
    %625 = vmatpush1.msra.mxu0 0.0
    %626 = vmatprep.subr.mxu0 0.0
    %627 = vmatpush1.msra.mxu0 0.0
    %628 = vmatprep.subr.mxu0 0.0
    %629 = vmatpush1.msra.mxu0 0.0
    %630 = vmatprep.subr.mxu0 0.0
    %631 = vmatpush1.msra.mxu0 0.0
    %632 = vmatprep.subr.mxu0 0.0
    %633 = vmatpush1.msra.mxu0 0.0
    %634 = vmatprep.subr.mxu0 0.0
    %635 = vmatpush1.msra.mxu0 0.0
    %636 = vmatprep.subr.mxu0 0.0
    %637 = vmatpush1.msra.mxu0 0.0
    %638 = vmatprep.subr.mxu0 0.0
    %639 = vmatpush1.msra.mxu0 0.0
    %640 = vmatprep.subr.mxu0 0.0
    %641 = vmatpush1.msra.mxu0 0.0
    %642 = vmatprep.subr.mxu0 0.0
    %643 = vmatpush1.msra.mxu0 0.0
    %644 = vmatprep.subr.mxu0 0.0
    %645 = vmatpush1.msra.mxu0 0.0
    %646 = vmatprep.subr.mxu0 0.0
    %647 = vmatpush1.msra.mxu0 0.0
    %648 = vmatprep.subr.mxu0 0.0
    %649 = vmatpush1.msra.mxu0 0.0
    %650 = vmatprep.subr.mxu0 0.0
    %651 = vmatpush1.msra.mxu0 0.0
    %652 = vmatprep.subr.mxu0 0.0
    %653 = vmatpush1.msra.mxu0 0.0
    %654 = vmatprep.subr.mxu0 0.0
    %655 = vmatpush1.msra.mxu0 0.0
    %656 = vmatprep.subr.mxu0 0.0
    %657 = vmatpush1.msra.mxu0 0.0
    %658 = vmatprep.mubr.f32.mxu0 0.0
    %659 = vmatmul.mubr.f32.gmra.mrb[0].mxu0 %v592
    %v660 = vpop.f32.mrb[0].mxu0
    %v661 = vadd.f32 0.0, %v660
    %v662 = vpop.f32.mrb[0].mxu0
    %v663 = vadd.f32 0.0, %v662
    %664 = vdwg.mxu0
    %v666 = vrot.slane %v661, 4
    %v668 = vadd.f32 %v136, %v666
    %v669 = vxor.u32 %v668, 2147483648
    %v670 = vmul.f32 %v669, 1.442695
    %v671 = vpow.pop %v670
    %v672 = vadd.f32 %v671, 1.0
    %v673 = vrcp.pop %v672
    %v674 = vmul.f32 1.0, %v673
    %v675 = vadd.f32 %v663, %v156
    %v677 = vrot.slane %v675, 4
    %v679 = vmul.f32 %v674, %v677
    %v680 = vadd.f32 %v138, %v679
    %v681 = vtanh.pop %v680
    %v682 = vsub.f32 1.0, %v674
    %684 = vrot.lane.b32.xlu0 %v681, 64
    %v685 = vpop.permute.xlu0 %684
    %v687 = vmul.f32 %v682, %v685
    %v688 = vrot.slane %v582, 7
    %v690 = vmul.f32 %v674, %v688
    %v691 = vadd.f32 %v687, %v690
    %693 = vrot.lane.b32.xlu0 %v691, 64
    %v694 = vpop.permute.xlu0 %693
    %vm696 = vcmask 520196
    %697 = vst.msk [vmem:[#allocation2] sm:$0x10] %vm696, %v694
    %v698 = vrot.slane %v691, 4
    %699 = vrot.lane.b32.xlu0 %v698, 64
    %v700 = vpop.permute.xlu0 %699
    %v701 = vsel %vm158, %v700, 0
    %703 = vmatprep.subr.mxu0 %v141
    %704 = vmatpush1.msra.mxu0 %v140
    %705 = vmatprep.subr.mxu0 %v143
    %706 = vmatpush1.msra.mxu0 %v142
    %707 = vmatprep.subr.mxu0 %v145
    %708 = vmatpush1.msra.mxu0 %v144
    %709 = vmatprep.subr.mxu0 %v147
    %710 = vmatpush1.msra.mxu0 %v146
    %711 = vmatprep.subr.mxu0 %v149
    %712 = vmatpush1.msra.mxu0 %v148
    %713 = vmatprep.subr.mxu0 %v151
    %714 = vmatpush1.msra.mxu0 %v150
    %715 = vmatprep.subr.mxu0 %v153
    %716 = vmatpush1.msra.mxu0 %v152
    %717 = vmatprep.subr.mxu0 %v155
    %718 = vmatpush1.msra.mxu0 %v154
    %719 = vmatprep.subr.mxu0 0.0
    %720 = vmatpush1.msra.mxu0 0.0
    %721 = vmatprep.subr.mxu0 0.0
    %722 = vmatpush1.msra.mxu0 0.0
    %723 = vmatprep.subr.mxu0 0.0
    %724 = vmatpush1.msra.mxu0 0.0
    %725 = vmatprep.subr.mxu0 0.0
    %726 = vmatpush1.msra.mxu0 0.0
    %727 = vmatprep.subr.mxu0 0.0
    %728 = vmatpush1.msra.mxu0 0.0
    %729 = vmatprep.subr.mxu0 0.0
    %730 = vmatpush1.msra.mxu0 0.0
    %731 = vmatprep.subr.mxu0 0.0
    %732 = vmatpush1.msra.mxu0 0.0
    %733 = vmatprep.subr.mxu0 0.0
    %734 = vmatpush1.msra.mxu0 0.0
    %735 = vmatprep.subr.mxu0 0.0
    %736 = vmatpush1.msra.mxu0 0.0
    %737 = vmatprep.subr.mxu0 0.0
    %738 = vmatpush1.msra.mxu0 0.0
    %739 = vmatprep.subr.mxu0 0.0
    %740 = vmatpush1.msra.mxu0 0.0
    %741 = vmatprep.subr.mxu0 0.0
    %742 = vmatpush1.msra.mxu0 0.0
    %743 = vmatprep.subr.mxu0 0.0
    %744 = vmatpush1.msra.mxu0 0.0
    %745 = vmatprep.subr.mxu0 0.0
    %746 = vmatpush1.msra.mxu0 0.0
    %747 = vmatprep.subr.mxu0 0.0
    %748 = vmatpush1.msra.mxu0 0.0
    %749 = vmatprep.subr.mxu0 0.0
    %750 = vmatpush1.msra.mxu0 0.0
    %751 = vmatprep.subr.mxu0 0.0
    %752 = vmatpush1.msra.mxu0 0.0
    %753 = vmatprep.subr.mxu0 0.0
    %754 = vmatpush1.msra.mxu0 0.0
    %755 = vmatprep.subr.mxu0 0.0
    %756 = vmatpush1.msra.mxu0 0.0
    %757 = vmatprep.subr.mxu0 0.0
    %758 = vmatpush1.msra.mxu0 0.0
    %759 = vmatprep.subr.mxu0 0.0
    %760 = vmatpush1.msra.mxu0 0.0
    %761 = vmatprep.subr.mxu0 0.0
    %762 = vmatpush1.msra.mxu0 0.0
    %763 = vmatprep.subr.mxu0 0.0
    %764 = vmatpush1.msra.mxu0 0.0
    %765 = vmatprep.subr.mxu0 0.0
    %766 = vmatpush1.msra.mxu0 0.0
    %767 = vmatprep.mubr.f32.mxu0 0.0
    %768 = vmatmul.mubr.f32.gmra.mrb[0].mxu0 %v701
    %v769 = vpop.f32.mrb[0].mxu0
    %v770 = vadd.f32 0.0, %v769
    %v771 = vpop.f32.mrb[0].mxu0
    %v772 = vadd.f32 0.0, %v771
    %773 = vdwg.mxu0
    %v775 = vrot.slane %v770, 3
    %v777 = vadd.f32 %v136, %v775
    %v778 = vxor.u32 %v777, 2147483648
    %v779 = vmul.f32 %v778, 1.442695
    %v780 = vpow.pop %v779
    %v781 = vadd.f32 %v780, 1.0
    %v782 = vrcp.pop %v781
    %v783 = vmul.f32 1.0, %v782
    %v784 = vadd.f32 %v772, %v156
    %v786 = vrot.slane %v784, 3
    %v788 = vmul.f32 %v783, %v786
    %v789 = vadd.f32 %v138, %v788
    %v790 = vtanh.pop %v789
    %v791 = vsub.f32 1.0, %v783
    %793 = vrot.lane.b32.xlu0 %v790, 64
    %v794 = vpop.permute.xlu0 %793
    %v796 = vmul.f32 %v791, %v794
    %v797 = vrot.slane %v691, 7
    %v799 = vmul.f32 %v783, %v797
    %v800 = vadd.f32 %v796, %v799
    %802 = vrot.lane.b32.xlu0 %v800, 64
    %v803 = vpop.permute.xlu0 %802
    %vm805 = vcmask 521221
    %806 = vst.msk [vmem:[#allocation2] sm:$0x20] %vm805, %v803
    %v807 = vrot.slane %v800, 5
    %808 = vrot.lane.b32.xlu0 %v807, 64
    %v809 = vpop.permute.xlu0 %808
    %v810 = vsel %vm158, %v809, 0
    %812 = vmatprep.subr.mxu0 %v141
    %813 = vmatpush1.msra.mxu0 %v140
    %814 = vmatprep.subr.mxu0 %v143
    %815 = vmatpush1.msra.mxu0 %v142
    %816 = vmatprep.subr.mxu0 %v145
    %817 = vmatpush1.msra.mxu0 %v144
    %818 = vmatprep.subr.mxu0 %v147
    %819 = vmatpush1.msra.mxu0 %v146
    %820 = vmatprep.subr.mxu0 %v149
    %821 = vmatpush1.msra.mxu0 %v148
    %822 = vmatprep.subr.mxu0 %v151
    %823 = vmatpush1.msra.mxu0 %v150
    %824 = vmatprep.subr.mxu0 %v153
    %825 = vmatpush1.msra.mxu0 %v152
    %826 = vmatprep.subr.mxu0 %v155
    %827 = vmatpush1.msra.mxu0 %v154
    %828 = vmatprep.subr.mxu0 0.0
    %829 = vmatpush1.msra.mxu0 0.0
    %830 = vmatprep.subr.mxu0 0.0
    %831 = vmatpush1.msra.mxu0 0.0
    %832 = vmatprep.subr.mxu0 0.0
    %833 = vmatpush1.msra.mxu0 0.0
    %834 = vmatprep.subr.mxu0 0.0
    %835 = vmatpush1.msra.mxu0 0.0
    %836 = vmatprep.subr.mxu0 0.0
    %837 = vmatpush1.msra.mxu0 0.0
    %838 = vmatprep.subr.mxu0 0.0
    %839 = vmatpush1.msra.mxu0 0.0
    %840 = vmatprep.subr.mxu0 0.0
    %841 = vmatpush1.msra.mxu0 0.0
    %842 = vmatprep.subr.mxu0 0.0
    %843 = vmatpush1.msra.mxu0 0.0
    %844 = vmatprep.subr.mxu0 0.0
    %845 = vmatpush1.msra.mxu0 0.0
    %846 = vmatprep.subr.mxu0 0.0
    %847 = vmatpush1.msra.mxu0 0.0
    %848 = vmatprep.subr.mxu0 0.0
    %849 = vmatpush1.msra.mxu0 0.0
    %850 = vmatprep.subr.mxu0 0.0
    %851 = vmatpush1.msra.mxu0 0.0
    %852 = vmatprep.subr.mxu0 0.0
    %853 = vmatpush1.msra.mxu0 0.0
    %854 = vmatprep.subr.mxu0 0.0
    %855 = vmatpush1.msra.mxu0 0.0
    %856 = vmatprep.subr.mxu0 0.0
    %857 = vmatpush1.msra.mxu0 0.0
    %858 = vmatprep.subr.mxu0 0.0
    %859 = vmatpush1.msra.mxu0 0.0
    %860 = vmatprep.subr.mxu0 0.0
    %861 = vmatpush1.msra.mxu0 0.0
    %862 = vmatprep.subr.mxu0 0.0
    %863 = vmatpush1.msra.mxu0 0.0
    %864 = vmatprep.subr.mxu0 0.0
    %865 = vmatpush1.msra.mxu0 0.0
    %866 = vmatprep.subr.mxu0 0.0
    %867 = vmatpush1.msra.mxu0 0.0
    %868 = vmatprep.subr.mxu0 0.0
    %869 = vmatpush1.msra.mxu0 0.0
    %870 = vmatprep.subr.mxu0 0.0
    %871 = vmatpush1.msra.mxu0 0.0
    %872 = vmatprep.subr.mxu0 0.0
    %873 = vmatpush1.msra.mxu0 0.0
    %874 = vmatprep.subr.mxu0 0.0
    %875 = vmatpush1.msra.mxu0 0.0
    %876 = vmatprep.mubr.f32.mxu0 0.0
    %877 = vmatmul.mubr.f32.gmra.mrb[0].mxu0 %v810
    %v878 = vpop.f32.mrb[0].mxu0
    %v879 = vadd.f32 0.0, %v878
    %v880 = vpop.f32.mrb[0].mxu0
    %v881 = vadd.f32 0.0, %v880
    %882 = vdwg.mxu0
    %v884 = vrot.slane %v879, 2
    %v886 = vadd.f32 %v136, %v884
    %v887 = vxor.u32 %v886, 2147483648
    %v888 = vmul.f32 %v887, 1.442695
    %v889 = vpow.pop %v888
    %v890 = vadd.f32 %v889, 1.0
    %v891 = vrcp.pop %v890
    %v892 = vmul.f32 1.0, %v891
    %v893 = vadd.f32 %v881, %v156
    %v895 = vrot.slane %v893, 2
    %v897 = vmul.f32 %v892, %v895
    %v898 = vadd.f32 %v138, %v897
    %v899 = vtanh.pop %v898
    %v900 = vsub.f32 1.0, %v892
    %902 = vrot.lane.b32.xlu0 %v899, 64
    %v903 = vpop.permute.xlu0 %902
    %v905 = vmul.f32 %v900, %v903
    %v906 = vrot.slane %v800, 7
    %v908 = vmul.f32 %v892, %v906
    %v909 = vadd.f32 %v905, %v908
    %911 = vrot.lane.b32.xlu0 %v909, 64
    %v912 = vpop.permute.xlu0 %911
    %vm914 = vcmask 522246
    %915 = vst.msk [vmem:[#allocation2] sm:$0x40] %vm914, %v912
    %v916 = vrot.slane %v909, 6
    %917 = vrot.lane.b32.xlu0 %v916, 64
    %v918 = vpop.permute.xlu0 %917
    %v919 = vsel %vm158, %v918, 0
    %921 = vmatprep.subr.mxu0 %v141
    %922 = vmatpush1.msra.mxu0 %v140
    %923 = vmatprep.subr.mxu0 %v143
    %924 = vmatpush1.msra.mxu0 %v142
    %925 = vmatprep.subr.mxu0 %v145
    %926 = vmatpush1.msra.mxu0 %v144
    %927 = vmatprep.subr.mxu0 %v147
    %928 = vmatpush1.msra.mxu0 %v146
    %929 = vmatprep.subr.mxu0 %v149
    %930 = vmatpush1.msra.mxu0 %v148
    %931 = vmatprep.subr.mxu0 %v151
    %932 = vmatpush1.msra.mxu0 %v150
    %933 = vmatprep.subr.mxu0 %v153
    %934 = vmatpush1.msra.mxu0 %v152
    %935 = vmatprep.subr.mxu0 %v155
    %936 = vmatpush1.msra.mxu0 %v154
    %937 = vmatprep.subr.mxu0 0.0
    %938 = vmatpush1.msra.mxu0 0.0
    %939 = vmatprep.subr.mxu0 0.0
    %940 = vmatpush1.msra.mxu0 0.0
    %941 = vmatprep.subr.mxu0 0.0
    %942 = vmatpush1.msra.mxu0 0.0
    %943 = vmatprep.subr.mxu0 0.0
    %944 = vmatpush1.msra.mxu0 0.0
    %945 = vmatprep.subr.mxu0 0.0
    %946 = vmatpush1.msra.mxu0 0.0
    %947 = vmatprep.subr.mxu0 0.0
    %948 = vmatpush1.msra.mxu0 0.0
    %949 = vmatprep.subr.mxu0 0.0
    %950 = vmatpush1.msra.mxu0 0.0
    %951 = vmatprep.subr.mxu0 0.0
    %952 = vmatpush1.msra.mxu0 0.0
    %953 = vmatprep.subr.mxu0 0.0
    %954 = vmatpush1.msra.mxu0 0.0
    %955 = vmatprep.subr.mxu0 0.0
    %956 = vmatpush1.msra.mxu0 0.0
    %957 = vmatprep.subr.mxu0 0.0
    %958 = vmatpush1.msra.mxu0 0.0
    %959 = vmatprep.subr.mxu0 0.0
    %960 = vmatpush1.msra.mxu0 0.0
    %961 = vmatprep.subr.mxu0 0.0
    %962 = vmatpush1.msra.mxu0 0.0
    %963 = vmatprep.subr.mxu0 0.0
    %964 = vmatpush1.msra.mxu0 0.0
    %965 = vmatprep.subr.mxu0 0.0
    %966 = vmatpush1.msra.mxu0 0.0
    %967 = vmatprep.subr.mxu0 0.0
    %968 = vmatpush1.msra.mxu0 0.0
    %969 = vmatprep.subr.mxu0 0.0
    %970 = vmatpush1.msra.mxu0 0.0
    %971 = vmatprep.subr.mxu0 0.0
    %972 = vmatpush1.msra.mxu0 0.0
    %973 = vmatprep.subr.mxu0 0.0
    %974 = vmatpush1.msra.mxu0 0.0
    %975 = vmatprep.subr.mxu0 0.0
    %976 = vmatpush1.msra.mxu0 0.0
    %977 = vmatprep.subr.mxu0 0.0
    %978 = vmatpush1.msra.mxu0 0.0
    %979 = vmatprep.subr.mxu0 0.0
    %980 = vmatpush1.msra.mxu0 0.0
    %981 = vmatprep.subr.mxu0 0.0
    %982 = vmatpush1.msra.mxu0 0.0
    %983 = vmatprep.subr.mxu0 0.0
    %984 = vmatpush1.msra.mxu0 0.0
    %985 = vmatprep.mubr.f32.mxu0 0.0
    %986 = vmatmul.mubr.f32.gmra.mrb[0].mxu0 %v919
    %v987 = vpop.f32.mrb[0].mxu0
    %v988 = vadd.f32 0.0, %v987
    %v989 = vpop.f32.mrb[0].mxu0
    %v990 = vadd.f32 0.0, %v989
    %991 = vdwg.mxu0
    %v993 = vrot.slane %v988, 1
    %v995 = vadd.f32 %v136, %v993
    %v996 = vxor.u32 %v995, 2147483648
    %v997 = vmul.f32 %v996, 1.442695
    %v998 = vpow.pop %v997
    %v999 = vadd.f32 %v998, 1.0
    %v1000 = vrcp.pop %v999
    %v1001 = vmul.f32 1.0, %v1000
    %v1002 = vadd.f32 %v990, %v156
    %v1004 = vrot.slane %v1002, 1
    %v1006 = vmul.f32 %v1001, %v1004
    %v1007 = vadd.f32 %v138, %v1006
    %v1008 = vtanh.pop %v1007
    %v1009 = vsub.f32 1.0, %v1001
    %1011 = vrot.lane.b32.xlu0 %v1008, 64
    %v1012 = vpop.permute.xlu0 %1011
    %v1014 = vmul.f32 %v1009, %v1012
    %v1015 = vrot.slane %v909, 7
    %v1017 = vmul.f32 %v1001, %v1015
    %v1018 = vadd.f32 %v1014, %v1017
    %1020 = vrot.lane.b32.xlu0 %v1018, 64
    %v1021 = vpop.permute.xlu0 %1020
    %vm1023 = vcmask 523271
    %1024 = vst.msk [vmem:[#allocation2] sm:$0x80] %vm1023, %v1021
    %1025 = vst.msk [vmem:[#allocation7 - $0x7] sm:$0x80] %vm1023, %v1021
    %v1026 = vld [vmem:[#allocation2] sm:$0xff]
    %v1027 = vld [vmem:[%s6] sm:$0xff]
    %v1028 = vld [vmem:[%s6 + $0x8] sm:$0xff]
    %v1029 = vld [vmem:[%s6 + $0x10] sm:$0xff]
    %v1030 = vld [vmem:[%s6 + $0x18] sm:$0xff]
    %v1031 = vld [vmem:[%s6 + $0x20] sm:$0xff]
    %v1032 = vld [vmem:[%s6 + $0x28] sm:$0xff]
    %v1033 = vld [vmem:[%s6 + $0x30] sm:$0xff]
    %v1034 = vld [vmem:[%s6 + $0x38] sm:$0xff]
    %v1035 = vld [vmem:[%s7] sm:$0x1]
    %v1037 = vlaneseq
    %v1038 = vshrl.u32 %v1037, 7
    %v1039 = vsub.s32 0, %v1038
    %v1040 = vrot.slane %v1035, %v1039
    %v1043 = vsel %vm158, %v1026, 0
    %1045 = vmatprep.subr.mxu0 0.0
    %1046 = vmatpush1.msra.mxu0 %v1027
    %1047 = vmatprep.subr.mxu0 0.0
    %1048 = vmatpush1.msra.mxu0 %v1028
    %1049 = vmatprep.subr.mxu0 0.0
    %1050 = vmatpush1.msra.mxu0 %v1029
    %1051 = vmatprep.subr.mxu0 0.0
    %1052 = vmatpush1.msra.mxu0 %v1030
    %1053 = vmatprep.subr.mxu0 0.0
    %1054 = vmatpush1.msra.mxu0 %v1031
    %1055 = vmatprep.subr.mxu0 0.0
    %1056 = vmatpush1.msra.mxu0 %v1032
    %1057 = vmatprep.subr.mxu0 0.0
    %1058 = vmatpush1.msra.mxu0 %v1033
    %1059 = vmatprep.subr.mxu0 0.0
    %1060 = vmatpush1.msra.mxu0 %v1034
    %1061 = vmatprep.subr.mxu0 0.0
    %1062 = vmatpush1.msra.mxu0 0.0
    %1063 = vmatprep.subr.mxu0 0.0
    %1064 = vmatpush1.msra.mxu0 0.0
    %1065 = vmatprep.subr.mxu0 0.0
    %1066 = vmatpush1.msra.mxu0 0.0
    %1067 = vmatprep.subr.mxu0 0.0
    %1068 = vmatpush1.msra.mxu0 0.0
    %1069 = vmatprep.subr.mxu0 0.0
    %1070 = vmatpush1.msra.mxu0 0.0
    %1071 = vmatprep.subr.mxu0 0.0
    %1072 = vmatpush1.msra.mxu0 0.0
    %1073 = vmatprep.subr.mxu0 0.0
    %1074 = vmatpush1.msra.mxu0 0.0
    %1075 = vmatprep.subr.mxu0 0.0
    %1076 = vmatpush1.msra.mxu0 0.0
    %1077 = vmatprep.subr.mxu0 0.0
    %1078 = vmatpush1.msra.mxu0 0.0
    %1079 = vmatprep.subr.mxu0 0.0
    %1080 = vmatpush1.msra.mxu0 0.0
    %1081 = vmatprep.subr.mxu0 0.0
    %1082 = vmatpush1.msra.mxu0 0.0
    %1083 = vmatprep.subr.mxu0 0.0
    %1084 = vmatpush1.msra.mxu0 0.0
    %1085 = vmatprep.subr.mxu0 0.0
    %1086 = vmatpush1.msra.mxu0 0.0
    %1087 = vmatprep.subr.mxu0 0.0
    %1088 = vmatpush1.msra.mxu0 0.0
    %1089 = vmatprep.subr.mxu0 0.0
    %1090 = vmatpush1.msra.mxu0 0.0
    %1091 = vmatprep.subr.mxu0 0.0
    %1092 = vmatpush1.msra.mxu0 0.0
    %1093 = vmatprep.subr.mxu0 0.0
    %1094 = vmatpush1.msra.mxu0 0.0
    %1095 = vmatprep.subr.mxu0 0.0
    %1096 = vmatpush1.msra.mxu0 0.0
    %1097 = vmatprep.subr.mxu0 0.0
    %1098 = vmatpush1.msra.mxu0 0.0
    %1099 = vmatprep.subr.mxu0 0.0
    %1100 = vmatpush1.msra.mxu0 0.0
    %1101 = vmatprep.subr.mxu0 0.0
    %1102 = vmatpush1.msra.mxu0 0.0
    %1103 = vmatprep.subr.mxu0 0.0
    %1104 = vmatpush1.msra.mxu0 0.0
    %1105 = vmatprep.subr.mxu0 0.0
    %1106 = vmatpush1.msra.mxu0 0.0
    %1107 = vmatprep.subr.mxu0 0.0
    %1108 = vmatpush1.msra.mxu0 0.0
    %1109 = vmatprep.mubr.f32.mxu0 0.0
    %1110 = vmatmul.mubr.f32.gmra.mrb[0].mxu0 %v1043
    %v1111 = vpop.f32.mrb[0].mxu0
    %v1112 = vadd.f32 %v1040, %v1111
    %v1113 = vpop.f32.mrb[0].mxu0
    %1114 = vdwg.mxu0
    %v1115 = vld [vmem:[%s8] sm:$0x1]
    %vm1116 = vcmp.ne.f32.partialorder %v1115, 0.0
    %v1117 = vsel %vm1116, 1, 0
    %v1118 = vlaneseq
    %v1119 = vshrl.u32 %v1118, 7
    %v1120 = vsub.s32 0, %v1119
    %v1121 = vrot.slane %v1117, %v1120
    %vm1122 = vcmp.eq.s32.totalorder %v1121, 1
    %v1123 = vsel %vm1122, %v1112, -1e+09
    %vm1124 = vcmask 130048
    %1125 = vst.msk [vmem:[#allocation6] sm:$0xff] %vm1124, %v1123
    // Predicated region
    $region42: #{tpu_custom_call.1} parent=1 // pred_check
      _
    $region43: #{tpu_custom_call.1} parent=1 // pred_check_branch
      %1127 = sbr.rel (0) target = $region45
    $region44: #{tpu_custom_call.1} parent=1 // pred_region
      %s1129 = ssub.s32 128, 128
      %1130 = vsyncadd [#allocation5], %s1129
      %s1132 = sshll.u32 [#allocation6], 4
      %s1133 = int_to_ptr.vmem [resolvable:$true] %s1132
      %1135 = dma.vmem_to_hbm [thread:$0]  %s1133, 128, %s9, [#allocation5]
    $region45: #{tpu_custom_call.1} parent=1 // pred_fallthru
      _
    // Predicated region
    $region46: #{tpu_custom_call.1} parent=1 // pred_check
      _
    $region47: #{tpu_custom_call.1} parent=1 // pred_check_branch
      %1137 = sbr.rel (0) target = $region49
    $region48: #{tpu_custom_call.1} parent=1 // pred_region
      %s1139 = ssub.s32 16, 16
      %1140 = vsyncadd [#allocation8], %s1139
      %s1142 = sshll.u32 [#allocation7], 4
      %s1143 = int_to_ptr.vmem [resolvable:$true] %s1142
      %1145 = dma.vmem_to_hbm [thread:$0]  %s1143, 16, %s10, [#allocation8]
    $region49: #{tpu_custom_call.1} parent=1 // pred_fallthru
      _
    // Predicated region
    $region50: #{tpu_custom_call.1} parent=1 // pred_check
      _
    $region51: #{tpu_custom_call.1} parent=1 // pred_check_branch
      %1147 = sbr.rel (0) target = $region53
    $region52: #{tpu_custom_call.1} parent=1 // pred_region
      %1148 = dma.done [#allocation5], 128
    $region53: #{tpu_custom_call.1} parent=1 // pred_fallthru
      _
    // Predicated region
    $region54: #{tpu_custom_call.1} parent=1 // pred_check
      _
    $region55: #{tpu_custom_call.1} parent=1 // pred_check_branch
      %1150 = sbr.rel (0) target = $region57
    $region56: #{tpu_custom_call.1} parent=1 // pred_region
      %1151 = dma.done [#allocation8], 16
    $region57: #{tpu_custom_call.1} parent=1 // pred_fallthru
      _
    %1152 = vsyncpa [#allocation4], 1
    %1153 = vsyncpa [#allocation5], 1
    %1154 = vsyncpa [#allocation8], 1

</llo_original>
